<compile_context>
chip_gen: v6e
topology: v6e:2x2x1
jax: 0.10.0
libtpu: 0.0.40
codegen_flags: <defaults>
</compile_context>

<pallas_src>
import functools

import jax
import jax.numpy as jnp
import numpy as np
from jax.experimental import pallas as pl
from jax.experimental.pallas import tpu as pltpu

EPS = 0.0      # GINConv default (train_eps=False)
LANE = 128     # TPU vreg lane width


def _round_up(v, m):
    return (v + m - 1) // m * m


# ---------------------------------------------------------------------------
# Pallas kernel: one grid step == one graph of the batch
# ---------------------------------------------------------------------------
def _gin_graph_kernel(*refs, num_mlps, num_classes):
    """refs = (adj, x, pool, [w1, b1, w2, b2] * num_mlps, out).

    adj  : (1, Np, Np) bf16, (1+eps) self-loop folded into the diagonal
    x    : (1, Np, Fp) bf16 node features of this graph (zero padded rows)
    pool : (1, 1, Np)  bf16 ones mask over the graph's valid nodes
    w*   : bf16 weights (lane-padded), b*: f32 biases
    out  : (1, 1, Cp)  f32 log-softmax logits for this graph
    """
    adj_ref, x_ref, pool_ref = refs[0], refs[1], refs[2]
    out_ref = refs[-1]
    w_refs = refs[3:-1]

    adj = adj_ref[0]            # (Np, Np) bf16, loaded once per graph
    h = x_ref[0]                # (Np, Fp) bf16 activations, bf16 end-to-end

    for l in range(num_mlps):
        w1 = w_refs[4 * l][...]
        b1 = w_refs[4 * l + 1][...]
        w2 = w_refs[4 * l + 2][...]
        b2 = w_refs[4 * l + 3][...]
        # aggregation + self-loop in one MXU dot (diag carries (1+eps))
        agg = jnp.dot(adj, h, preferred_element_type=jnp.float32)
        # MLP: Linear -> ReLU -> Linear  (bf16 MXU dots, f32 bias/ReLU on VPU)
        z = jnp.dot(agg.astype(jnp.bfloat16), w1,
                    preferred_element_type=jnp.float32) + b1
        z = jnp.maximum(z, 0.0)
        z = jnp.dot(z.astype(jnp.bfloat16), w2,
                    preferred_element_type=jnp.float32) + b2
        if l < num_mlps - 1:    # inter-layer ReLU (none after conv_out)
            z = jnp.maximum(z, 0.0)
        h = z.astype(jnp.bfloat16)

    # global_mean_pool: bf16 ones-mask sum on the MXU, exact f32 1/count scale
    pool_row = pool_ref[0]                                      # (1, Np) bf16
    pooled = jnp.dot(pool_row, h, preferred_element_type=jnp.float32)
    count = jnp.sum(pool_row.astype(jnp.float32))
    logits = pooled * (1.0 / count)                             # (1, Cp) f32

    # masked log_softmax over the real (unpadded) class lanes
    lane = jax.lax.broadcasted_iota(jnp.int32, logits.shape, 1)
    valid = lane < num_classes
    logits = jnp.where(valid, logits, -1e30)
    m = jnp.max(logits, axis=-1, keepdims=True)
    s = logits - m
    e = jnp.where(valid, jnp.exp(s), 0.0)
    lse = jnp.log(jnp.sum(e, axis=-1, keepdims=True))
    out_ref[0] = s - lse


# ---------------------------------------------------------------------------
# Wrapper
# ---------------------------------------------------------------------------
def _vmem_capacity_bytes():
    """Per-generation physical VMEM (v5e/v6e: 128 MiB, v7x: 64 MiB)."""
    try:
        info = pltpu.get_tpu_info()
        cap = getattr(info, "vmem_capacity_bytes", None)
        if cap:
            return int(cap)
    except Exception:
        pass
    return 64 * 1024 * 1024   # conservative: assume v7x


def gin_forward(x, adj, batch, params):
    """GIN forward: one pallas_call, grid over graphs of the batch.

    Assumes the standard PyG batching convention: nodes of each graph are
    contiguous in `x`/`batch` and edges never cross graphs.
    """
    x = np.array(x, np.float32)
    adj = np.array(adj, np.float32)
    batch = np.array(batch, np.int64)
    n, f = x.shape
    num_graphs = int(batch.max()) + 1
    counts = np.bincount(batch, minlength=num_graphs)
    offsets = np.concatenate([[0], np.cumsum(counts)])

    mlps = [params["conv_in"], *params["hidden"], params["conv_out"]]
    num_classes = int(mlps[-1][2].shape[1])

    # fold the (1+eps) self-loop into the adjacency diagonal (exact in bf16)
    adj_sl = adj.copy()
    adj_sl[np.arange(n), np.arange(n)] += (1.0 + EPS)

    n_max = int(counts.max())
    n_pad = _round_up(n_max, LANE)          # lane-dense: N is a lane/K dim
    f_pad = _round_up(f, LANE)
    c_pad = _round_up(num_classes, LANE)

    # per-graph blocks (block-diagonal structure of the batched graph)
    adj_blk = np.zeros((num_graphs, n_pad, n_pad), np.float32)
    x_blk = np.zeros((num_graphs, n_pad, f_pad), np.float32)
    pool_blk = np.zeros((num_graphs, 1, n_pad), np.float32)
    for g in range(num_graphs):
        o, c = int(offsets[g]), int(counts[g])
        adj_blk[g, :c, :c] = adj_sl[o:o + c, o:o + c]
        x_blk[g, :c, :f] = x[o:o + c]
        pool_blk[g, 0, :c] = 1.0

    adj_blk = jnp.asarray(adj_blk, jnp.bfloat16)   # small-int + 1.0: exact
    x_blk = jnp.asarray(x_blk, jnp.bfloat16)       # bf16 activations
    pool_blk = jnp.asarray(pool_blk, jnp.bfloat16)  # ones mask: exact

    def pad2(a, rows, cols, dt):
        a = np.asarray(a, np.float32)
        out = np.zeros((rows, cols), np.float32)
        out[:a.shape[0], :a.shape[1]] = a
        return jnp.asarray(out, dt)

    flat_w = []
    dims = []
    for (w1, b1, w2, b2) in mlps:
        di = _round_up(w1.shape[0], LANE)
        dh = _round_up(w1.shape[1], LANE)
        do = _round_up(w2.shape[1], LANE)
        dims.append((di, dh, do))
        flat_w += [pad2(w1, di, dh, jnp.bfloat16),
                   pad2(np.asarray(b1).reshape(1, -1), 1, dh, jnp.float32),
                   pad2(w2, dh, do, jnp.bfloat16),
                   pad2(np.asarray(b2).reshape(1, -1), 1, do, jnp.float32)]

    inputs = [adj_blk, x_blk, pool_blk, *flat_w]

    # BlockSpecs: per-graph blocks for adj/x/pool/out; weights resident
    in_specs = [
        pl.BlockSpec((1, n_pad, n_pad), lambda g: (g, 0, 0)),
        pl.BlockSpec((1, n_pad, f_pad), lambda g: (g, 0, 0)),
        pl.BlockSpec((1, 1, n_pad), lambda g: (g, 0, 0)),
    ]
    for w in flat_w:
        in_specs.append(pl.BlockSpec(w.shape, lambda g: (0, 0)))
    out_spec = pl.BlockSpec((1, 1, c_pad), lambda g: (g, 0, 0))

    # advisory cost estimate for the XLA scheduler
    flops = 0
    for (di, dh, do) in dims:
        flops += 2 * n_pad * n_pad * di      # A @ h
        flops += 2 * n_pad * di * dh         # Linear 1
        flops += 2 * n_pad * dh * do         # Linear 2
    flops += 2 * n_pad * c_pad               # pooling matmul
    flops *= num_graphs
    bytes_accessed = sum(int(np.prod(a.shape)) * a.dtype.itemsize
                         for a in inputs) + num_graphs * c_pad * 4

    # size VMEM limit from the actual (double-buffered) per-step footprint,
    # capped per chip generation
    per_step = (n_pad * n_pad * 2 + n_pad * f_pad * 2 + n_pad * 2 + c_pad * 4)
    per_step = 2 * per_step
    per_step += 2 * sum(int(np.prod(a.shape)) * a.dtype.itemsize
                        for a in flat_w)
    cap = _vmem_capacity_bytes()
    vmem_limit = int(min(0.9 * cap, max(4 * per_step, 16 * 1024 * 1024)))

    out_pad = pl.pallas_call(
        functools.partial(_gin_graph_kernel, num_mlps=len(mlps),
                          num_classes=num_classes),
        grid=(num_graphs,),
        out_shape=jax.ShapeDtypeStruct((num_graphs, 1, c_pad), jnp.float32),
        in_specs=in_specs,
        out_specs=out_spec,
        compiler_params=pltpu.CompilerParams(
            dimension_semantics=("parallel",),
            vmem_limit_bytes=vmem_limit),
        cost_estimate=pl.CostEstimate(
            flops=int(flops),
            transcendentals=int(num_graphs * (c_pad + 1)),
            bytes_accessed=int(bytes_accessed)),
    )(*inputs)
    return out_pad[:, 0, :num_classes]


# ---------------------------------------------------------------------------
# Pure-JAX reference mirroring the kernel math (bf16 MXU dots, f32 accumulate)
# ---------------------------------------------------------------------------
def gin_forward_ref(x, adj, batch, params):
    x = jnp.asarray(x, jnp.float32)
    adj = jnp.asarray(adj, jnp.float32)
    batch = jnp.asarray(batch, jnp.int32)
    n = x.shape[0]
    adj_sl = adj + (1.0 + EPS) * jnp.eye(n, dtype=jnp.float32)

    def mmf(a, b):
        return jnp.dot(a.astype(jnp.bfloat16), b.astype(jnp.bfloat16),
                       preferred_element_type=jnp.float32)

    mlps = [params["conv_in"], *params["hidden"], params["conv_out"]]
    h = x
    for l, (w1, b1, w2, b2) in enumerate(mlps):
        agg = mmf(adj_sl, h)
        z = jnp.maximum(mmf(agg, w1) + jnp.reshape(b1, (1, -1)), 0.0)
        z = mmf(z, w2) + jnp.reshape(b2, (1, -1))
        if l < len(mlps) - 1:
            z = jnp.maximum(z, 0.0)
        h = z

    num_graphs = int(jnp.max(batch)) + 1
    pool_ones = (batch[None, :] ==
                 jnp.arange(num_graphs)[:, None]).astype(jnp.float32)
    counts = pool_ones.sum(axis=1, keepdims=True)
    logits = mmf(pool_ones, h) * (1.0 / counts)
    return jax.nn.log_softmax(logits, axis=-1)


# ---------------------------------------------------------------------------
# Parameter construction
# ---------------------------------------------------------------------------
def make_mlp_params(key, d_in, d_hidden, d_out):
    k1, k2 = jax.random.split(key)
    w1 = (jax.random.normal(k1, (d_in, d_hidden), jnp.float32)
          / jnp.sqrt(jnp.float32(d_in)))
    b1 = jnp.zeros((1, d_hidden), jnp.float32)
    w2 = (jax.random.normal(k2, (d_hidden, d_out), jnp.float32)
          / jnp.sqrt(jnp.float32(d_hidden)))
    b2 = jnp.zeros((1, d_out), jnp.float32)
    return (w1, b1, w2, b2)


if __name__ == "__main__":
    # Small synthetic graph batch: 2 graphs x 8 nodes = 16 nodes.
    num_hidden_layers = 1
    num_node_features = 8
    hidden_channels = 32
    num_classes = 4
    num_graphs = 2
    nodes_per_graph = 8
    num_nodes = num_graphs * nodes_per_graph

    key = jax.random.PRNGKey(0)
    key, kx, kin, kout, *khid = jax.random.split(key, 4 + num_hidden_layers)

    # node features
    x = jax.random.normal(kx, (num_nodes, num_node_features), jnp.float32)

    # edge_index: directed ring within each graph (both directions)
    src, dst = [], []
    for gi in range(num_graphs):
        base = gi * nodes_per_graph
        for i in range(nodes_per_graph):
            a = base + i
            b = base + (i + 1) % nodes_per_graph
            src += [a, b]
            dst += [b, a]
    edge_index = np.stack([np.array(src), np.array(dst)])  # [2, num_edges]

    # dense adjacency A[dst, src] (message x_src summed into dst)
    adj_np = np.zeros((num_nodes, num_nodes), dtype=np.float32)
    for s, d in zip(edge_index[0], edge_index[1]):
        adj_np[d, s] += 1.0
    adj = jnp.asarray(adj_np)

    # batch vector (nodes of each graph contiguous, PyG convention)
    batch = np.repeat(np.arange(num_graphs), nodes_per_graph)

    # deterministic parameters
    params = {
        "conv_in": make_mlp_params(kin, num_node_features, hidden_channels,
                                   hidden_channels),
        "hidden": [make_mlp_params(k, hidden_channels, hidden_channels,
                                   hidden_channels) for k in khid],
        "conv_out": make_mlp_params(kout, hidden_channels, hidden_channels,
                                    num_classes),
    }

    out = gin_forward(x, adj, batch, params)
    out = jax.block_until_ready(out)

    ref = gin_forward_ref(x, adj, batch, params)
    np.testing.assert_allclose(np.asarray(out), np.asarray(ref),
                               rtol=1e-3, atol=1e-3)
    assert out.shape == (num_graphs, num_classes)

    print("KERNEL_OK")
</pallas_src>

<mosaic_0001>
module attributes {stable_mosaic.version = 11 : i64} {
  func.func @_gin_graph_kernel(%arg0: i32, %arg1: memref<1x128x128xbf16, #tpu.memory_space<vmem>>, %arg2: memref<1x128x128xbf16, #tpu.memory_space<vmem>>, %arg3: memref<1x1x128xbf16, #tpu.memory_space<vmem>>, %arg4: memref<128x128xbf16, #tpu.memory_space<vmem>>, %arg5: memref<1x128xf32, #tpu.memory_space<vmem>>, %arg6: memref<128x128xbf16, #tpu.memory_space<vmem>>, %arg7: memref<1x128xf32, #tpu.memory_space<vmem>>, %arg8: memref<128x128xbf16, #tpu.memory_space<vmem>>, %arg9: memref<1x128xf32, #tpu.memory_space<vmem>>, %arg10: memref<128x128xbf16, #tpu.memory_space<vmem>>, %arg11: memref<1x128xf32, #tpu.memory_space<vmem>>, %arg12: memref<128x128xbf16, #tpu.memory_space<vmem>>, %arg13: memref<1x128xf32, #tpu.memory_space<vmem>>, %arg14: memref<128x128xbf16, #tpu.memory_space<vmem>>, %arg15: memref<1x128xf32, #tpu.memory_space<vmem>>, %arg16: memref<1x1x128xf32, #tpu.memory_space<vmem>>) attributes {dimension_semantics = [#tpu.dimension_semantics<parallel>], iteration_bounds = array<i64: 2>, scalar_prefetch = 0 : i64, scratch_operands = 0 : i64, tpu.core_type = #tpu.core_type<tc>, window_params = [{transform_indices = @transform_0, window_bounds = array<i64: 1, 128, 128>}, {transform_indices = @transform_1, window_bounds = array<i64: 1, 128, 128>}, {transform_indices = @transform_2, window_bounds = array<i64: 1, 1, 128>}, {pipeline_mode = #tpu.pipeline_mode<synchronous>, transform_indices = @transform_3, window_bounds = array<i64: 128, 128>}, {pipeline_mode = #tpu.pipeline_mode<synchronous>, transform_indices = @transform_4, window_bounds = array<i64: 1, 128>}, {pipeline_mode = #tpu.pipeline_mode<synchronous>, transform_indices = @transform_5, window_bounds = array<i64: 128, 128>}, {pipeline_mode = #tpu.pipeline_mode<synchronous>, transform_indices = @transform_6, window_bounds = array<i64: 1, 128>}, {pipeline_mode = #tpu.pipeline_mode<synchronous>, transform_indices = @transform_7, window_bounds = array<i64: 128, 128>}, {pipeline_mode = #tpu.pipeline_mode<synchronous>, transform_indices = @transform_8, window_bounds = array<i64: 1, 128>}, {pipeline_mode = #tpu.pipeline_mode<synchronous>, transform_indices = @transform_9, window_bounds = array<i64: 128, 128>}, {pipeline_mode = #tpu.pipeline_mode<synchronous>, transform_indices = @transform_10, window_bounds = array<i64: 1, 128>}, {pipeline_mode = #tpu.pipeline_mode<synchronous>, transform_indices = @transform_11, window_bounds = array<i64: 128, 128>}, {pipeline_mode = #tpu.pipeline_mode<synchronous>, transform_indices = @transform_12, window_bounds = array<i64: 1, 128>}, {pipeline_mode = #tpu.pipeline_mode<synchronous>, transform_indices = @transform_13, window_bounds = array<i64: 128, 128>}, {pipeline_mode = #tpu.pipeline_mode<synchronous>, transform_indices = @transform_14, window_bounds = array<i64: 1, 128>}, {transform_indices = @transform_15, window_bounds = array<i64: 1, 1, 128>}]} {
    %c0 = arith.constant 0 : index
    %c0_0 = arith.constant 0 : index
    %c0_1 = arith.constant 0 : index
    %0 = vector.load %arg1[%c0, %c0_0, %c0_1] : memref<1x128x128xbf16, #tpu.memory_space<vmem>>, vector<1x128x128xbf16>
    %1 = vector.shape_cast %0 : vector<1x128x128xbf16> to vector<128x128xbf16>
    %c0_2 = arith.constant 0 : index
    %c0_3 = arith.constant 0 : index
    %c0_4 = arith.constant 0 : index
    %2 = vector.load %arg2[%c0_2, %c0_3, %c0_4] : memref<1x128x128xbf16, #tpu.memory_space<vmem>>, vector<1x128x128xbf16>
    %3 = vector.shape_cast %2 : vector<1x128x128xbf16> to vector<128x128xbf16>
    %c0_5 = arith.constant 0 : index
    %c0_6 = arith.constant 0 : index
    %4 = vector.load %arg4[%c0_5, %c0_6] : memref<128x128xbf16, #tpu.memory_space<vmem>>, vector<128x128xbf16>
    %c0_7 = arith.constant 0 : index
    %c0_8 = arith.constant 0 : index
    %5 = vector.load %arg5[%c0_7, %c0_8] : memref<1x128xf32, #tpu.memory_space<vmem>>, vector<1x128xf32>
    %c0_9 = arith.constant 0 : index
    %c0_10 = arith.constant 0 : index
    %6 = vector.load %arg6[%c0_9, %c0_10] : memref<128x128xbf16, #tpu.memory_space<vmem>>, vector<128x128xbf16>
    %c0_11 = arith.constant 0 : index
    %c0_12 = arith.constant 0 : index
    %7 = vector.load %arg7[%c0_11, %c0_12] : memref<1x128xf32, #tpu.memory_space<vmem>>, vector<1x128xf32>
    %cst = arith.constant dense<0.000000e+00> : vector<128x128xf32>
    %8 = tpu.matmul %1, %3, %cst {dimension_numbers = #tpu.dot_dimension_numbers<[1], [0], [0], [1], [0, 0, 1, 1], [], []>} : vector<128x128xbf16>, vector<128x128xbf16>, vector<128x128xf32> -> vector<128x128xf32>
    %9 = arith.truncf %8 : vector<128x128xf32> to vector<128x128xbf16>
    %cst_13 = arith.constant dense<0.000000e+00> : vector<128x128xf32>
    %10 = tpu.matmul %9, %4, %cst_13 {dimension_numbers = #tpu.dot_dimension_numbers<[1], [0], [0], [1], [0, 0, 1, 1], [], []>} : vector<128x128xbf16>, vector<128x128xbf16>, vector<128x128xf32> -> vector<128x128xf32>
    %11 = vector.broadcast %5 : vector<1x128xf32> to vector<128x128xf32>
    %12 = arith.addf %10, %11 : vector<128x128xf32>
    %cst_14 = arith.constant 0.000000e+00 : f32
    %13 = vector.broadcast %cst_14 : f32 to vector<128x128xf32>
    %14 = arith.maximumf %12, %13 : vector<128x128xf32>
    %15 = arith.truncf %14 : vector<128x128xf32> to vector<128x128xbf16>
    %cst_15 = arith.constant dense<0.000000e+00> : vector<128x128xf32>
    %16 = tpu.matmul %15, %6, %cst_15 {dimension_numbers = #tpu.dot_dimension_numbers<[1], [0], [0], [1], [0, 0, 1, 1], [], []>} : vector<128x128xbf16>, vector<128x128xbf16>, vector<128x128xf32> -> vector<128x128xf32>
    %17 = vector.broadcast %7 : vector<1x128xf32> to vector<128x128xf32>
    %18 = arith.addf %16, %17 : vector<128x128xf32>
    %cst_16 = arith.constant 0.000000e+00 : f32
    %19 = vector.broadcast %cst_16 : f32 to vector<128x128xf32>
    %20 = arith.maximumf %18, %19 : vector<128x128xf32>
    %21 = arith.truncf %20 : vector<128x128xf32> to vector<128x128xbf16>
    %c0_17 = arith.constant 0 : index
    %c0_18 = arith.constant 0 : index
    %22 = vector.load %arg8[%c0_17, %c0_18] : memref<128x128xbf16, #tpu.memory_space<vmem>>, vector<128x128xbf16>
    %c0_19 = arith.constant 0 : index
    %c0_20 = arith.constant 0 : index
    %23 = vector.load %arg9[%c0_19, %c0_20] : memref<1x128xf32, #tpu.memory_space<vmem>>, vector<1x128xf32>
    %c0_21 = arith.constant 0 : index
    %c0_22 = arith.constant 0 : index
    %24 = vector.load %arg10[%c0_21, %c0_22] : memref<128x128xbf16, #tpu.memory_space<vmem>>, vector<128x128xbf16>
    %c0_23 = arith.constant 0 : index
    %c0_24 = arith.constant 0 : index
    %25 = vector.load %arg11[%c0_23, %c0_24] : memref<1x128xf32, #tpu.memory_space<vmem>>, vector<1x128xf32>
    %cst_25 = arith.constant dense<0.000000e+00> : vector<128x128xf32>
    %26 = tpu.matmul %1, %21, %cst_25 {dimension_numbers = #tpu.dot_dimension_numbers<[1], [0], [0], [1], [0, 0, 1, 1], [], []>} : vector<128x128xbf16>, vector<128x128xbf16>, vector<128x128xf32> -> vector<128x128xf32>
    %27 = arith.truncf %26 : vector<128x128xf32> to vector<128x128xbf16>
    %cst_26 = arith.constant dense<0.000000e+00> : vector<128x128xf32>
    %28 = tpu.matmul %27, %22, %cst_26 {dimension_numbers = #tpu.dot_dimension_numbers<[1], [0], [0], [1], [0, 0, 1, 1], [], []>} : vector<128x128xbf16>, vector<128x128xbf16>, vector<128x128xf32> -> vector<128x128xf32>
    %29 = vector.broadcast %23 : vector<1x128xf32> to vector<128x128xf32>
    %30 = arith.addf %28, %29 : vector<128x128xf32>
    %cst_27 = arith.constant 0.000000e+00 : f32
    %31 = vector.broadcast %cst_27 : f32 to vector<128x128xf32>
    %32 = arith.maximumf %30, %31 : vector<128x128xf32>
    %33 = arith.truncf %32 : vector<128x128xf32> to vector<128x128xbf16>
    %cst_28 = arith.constant dense<0.000000e+00> : vector<128x128xf32>
    %34 = tpu.matmul %33, %24, %cst_28 {dimension_numbers = #tpu.dot_dimension_numbers<[1], [0], [0], [1], [0, 0, 1, 1], [], []>} : vector<128x128xbf16>, vector<128x128xbf16>, vector<128x128xf32> -> vector<128x128xf32>
    %35 = vector.broadcast %25 : vector<1x128xf32> to vector<128x128xf32>
    %36 = arith.addf %34, %35 : vector<128x128xf32>
    %cst_29 = arith.constant 0.000000e+00 : f32
    %37 = vector.broadcast %cst_29 : f32 to vector<128x128xf32>
    %38 = arith.maximumf %36, %37 : vector<128x128xf32>
    %39 = arith.truncf %38 : vector<128x128xf32> to vector<128x128xbf16>
    %c0_30 = arith.constant 0 : index
    %c0_31 = arith.constant 0 : index
    %40 = vector.load %arg12[%c0_30, %c0_31] : memref<128x128xbf16, #tpu.memory_space<vmem>>, vector<128x128xbf16>
    %c0_32 = arith.constant 0 : index
    %c0_33 = arith.constant 0 : index
    %41 = vector.load %arg13[%c0_32, %c0_33] : memref<1x128xf32, #tpu.memory_space<vmem>>, vector<1x128xf32>
    %c0_34 = arith.constant 0 : index
    %c0_35 = arith.constant 0 : index
    %42 = vector.load %arg14[%c0_34, %c0_35] : memref<128x128xbf16, #tpu.memory_space<vmem>>, vector<128x128xbf16>
    %c0_36 = arith.constant 0 : index
    %c0_37 = arith.constant 0 : index
    %43 = vector.load %arg15[%c0_36, %c0_37] : memref<1x128xf32, #tpu.memory_space<vmem>>, vector<1x128xf32>
    %cst_38 = arith.constant dense<0.000000e+00> : vector<128x128xf32>
    %44 = tpu.matmul %1, %39, %cst_38 {dimension_numbers = #tpu.dot_dimension_numbers<[1], [0], [0], [1], [0, 0, 1, 1], [], []>} : vector<128x128xbf16>, vector<128x128xbf16>, vector<128x128xf32> -> vector<128x128xf32>
    %45 = arith.truncf %44 : vector<128x128xf32> to vector<128x128xbf16>
    %cst_39 = arith.constant dense<0.000000e+00> : vector<128x128xf32>
    %46 = tpu.matmul %45, %40, %cst_39 {dimension_numbers = #tpu.dot_dimension_numbers<[1], [0], [0], [1], [0, 0, 1, 1], [], []>} : vector<128x128xbf16>, vector<128x128xbf16>, vector<128x128xf32> -> vector<128x128xf32>
    %47 = vector.broadcast %41 : vector<1x128xf32> to vector<128x128xf32>
    %48 = arith.addf %46, %47 : vector<128x128xf32>
    %cst_40 = arith.constant 0.000000e+00 : f32
    %49 = vector.broadcast %cst_40 : f32 to vector<128x128xf32>
    %50 = arith.maximumf %48, %49 : vector<128x128xf32>
    %51 = arith.truncf %50 : vector<128x128xf32> to vector<128x128xbf16>
    %cst_41 = arith.constant dense<0.000000e+00> : vector<128x128xf32>
    %52 = tpu.matmul %51, %42, %cst_41 {dimension_numbers = #tpu.dot_dimension_numbers<[1], [0], [0], [1], [0, 0, 1, 1], [], []>} : vector<128x128xbf16>, vector<128x128xbf16>, vector<128x128xf32> -> vector<128x128xf32>
    %53 = vector.broadcast %43 : vector<1x128xf32> to vector<128x128xf32>
    %54 = arith.addf %52, %53 : vector<128x128xf32>
    %55 = arith.truncf %54 : vector<128x128xf32> to vector<128x128xbf16>
    %c0_42 = arith.constant 0 : index
    %c0_43 = arith.constant 0 : index
    %c0_44 = arith.constant 0 : index
    %56 = vector.load %arg3[%c0_42, %c0_43, %c0_44] : memref<1x1x128xbf16, #tpu.memory_space<vmem>>, vector<1x1x128xbf16>
    %57 = vector.shape_cast %56 : vector<1x1x128xbf16> to vector<1x128xbf16>
    %cst_45 = arith.constant dense<0.000000e+00> : vector<1x128xf32>
    %58 = tpu.matmul %57, %55, %cst_45 {dimension_numbers = #tpu.dot_dimension_numbers<[1], [0], [0], [1], [0, 0, 1, 1], [], []>} : vector<1x128xbf16>, vector<128x128xbf16>, vector<1x128xf32> -> vector<1x128xf32>
    %59 = arith.extf %57 : vector<1x128xbf16> to vector<1x128xf32>
    %60 = vector.shape_cast %59 : vector<1x128xf32> to vector<1x1x128xf32>
    %cst_46 = arith.constant dense<0.000000e+00> : vector<1xf32>
    %61 = vector.multi_reduction <add>, %60, %cst_46 [1, 2] : vector<1x1x128xf32> to vector<1xf32>
    %62 = vector.shape_cast %61 : vector<1xf32> to vector<1x1x1xf32>
    %63 = vector.extract %62[0, 0, 0] : f32 from vector<1x1x1xf32>
    %cst_47 = arith.constant 1.000000e+00 : f32
    %64 = arith.divf %cst_47, %63 : f32
    %65 = vector.broadcast %64 : f32 to vector<1x128xf32>
    %66 = arith.mulf %58, %65 : vector<1x128xf32>
    %67 = tpu.iota {dimensions = array<i32: 1>} : vector<1x128xi32>
    %c4_i32 = arith.constant 4 : i32
    %68 = vector.broadcast %c4_i32 : i32 to vector<1x128xi32>
    %69 = arith.cmpi slt, %67, %68 : vector<1x128xi32>
    %cst_48 = arith.constant -1.000000e+30 : f32
    %70 = vector.broadcast %cst_48 : f32 to vector<1x128xf32>
    %71 = arith.select %69, %66, %70 : vector<1x128xi1>, vector<1x128xf32>
    %cst_49 = arith.constant dense<0xFF800000> : vector<1xf32>
    %72 = vector.multi_reduction <maximumf>, %71, %cst_49 [1] : vector<1x128xf32> to vector<1xf32>
    %73 = vector.shape_cast %72 : vector<1xf32> to vector<1x1xf32>
    %74 = vector.broadcast %73 : vector<1x1xf32> to vector<1x128xf32>
    %75 = arith.subf %71, %74 : vector<1x128xf32>
    %76 = math.exp %75 : vector<1x128xf32>
    %cst_50 = arith.constant 0.000000e+00 : f32
    %77 = vector.broadcast %cst_50 : f32 to vector<1x128xf32>
    %78 = arith.select %69, %76, %77 : vector<1x128xi1>, vector<1x128xf32>
    %cst_51 = arith.constant dense<0.000000e+00> : vector<1xf32>
    %79 = vector.multi_reduction <add>, %78, %cst_51 [1] : vector<1x128xf32> to vector<1xf32>
    %80 = vector.shape_cast %79 : vector<1xf32> to vector<1x1xf32>
    %81 = math.log %80 : vector<1x1xf32>
    %82 = vector.broadcast %81 : vector<1x1xf32> to vector<1x128xf32>
    %83 = arith.subf %75, %82 : vector<1x128xf32>
    %c0_52 = arith.constant 0 : index
    %c0_53 = arith.constant 0 : index
    %c0_54 = arith.constant 0 : index
    %84 = vector.load %arg16[%c0_52, %c0_53, %c0_54] : memref<1x1x128xf32, #tpu.memory_space<vmem>>, vector<1x1x128xf32>
    %85 = vector.shape_cast %84 : vector<1x1x128xf32> to vector<1x128xf32>
    %86 = vector.shape_cast %83 : vector<1x128xf32> to vector<1x1x128xf32>
    tpu.vector_store %arg16[%c0_52, %c0_53, %c0_54], %86 {strides = array<i32>} : memref<1x1x128xf32, #tpu.memory_space<vmem>>, vector<1x1x128xf32>,
    return
  }
  func.func @transform_0(%arg0: i32) -> (i32, i32, i32) {
    %c0_i32 = arith.constant 0 : i32
    %c0_i32_0 = arith.constant 0 : i32
    %c0_i32_1 = arith.constant 0 : i32
    return %arg0, %c0_i32, %c0_i32_0 : i32, i32, i32
  }
  func.func @transform_1(%arg0: i32) -> (i32, i32, i32) {
    %c0_i32 = arith.constant 0 : i32
    %c0_i32_0 = arith.constant 0 : i32
    %c0_i32_1 = arith.constant 0 : i32
    return %arg0, %c0_i32, %c0_i32_0 : i32, i32, i32
  }
  func.func @transform_2(%arg0: i32) -> (i32, i32, i32) {
    %c0_i32 = arith.constant 0 : i32
    %c0_i32_0 = arith.constant 0 : i32
    %c0_i32_1 = arith.constant 0 : i32
    return %arg0, %c0_i32, %c0_i32_0 : i32, i32, i32
  }
  func.func @transform_3(%arg0: i32) -> (i32, i32) {
    %c0_i32 = arith.constant 0 : i32
    %c0_i32_0 = arith.constant 0 : i32
    %c0_i32_1 = arith.constant 0 : i32
    return %c0_i32, %c0_i32_0 : i32, i32
  }
  func.func @transform_4(%arg0: i32) -> (i32, i32) {
    %c0_i32 = arith.constant 0 : i32
    %c0_i32_0 = arith.constant 0 : i32
    %c0_i32_1 = arith.constant 0 : i32
    return %c0_i32, %c0_i32_0 : i32, i32
  }
  func.func @transform_5(%arg0: i32) -> (i32, i32) {
    %c0_i32 = arith.constant 0 : i32
    %c0_i32_0 = arith.constant 0 : i32
    %c0_i32_1 = arith.constant 0 : i32
    return %c0_i32, %c0_i32_0 : i32, i32
  }
  func.func @transform_6(%arg0: i32) -> (i32, i32) {
    %c0_i32 = arith.constant 0 : i32
    %c0_i32_0 = arith.constant 0 : i32
    %c0_i32_1 = arith.constant 0 : i32
    return %c0_i32, %c0_i32_0 : i32, i32
  }
  func.func @transform_7(%arg0: i32) -> (i32, i32) {
    %c0_i32 = arith.constant 0 : i32
    %c0_i32_0 = arith.constant 0 : i32
    %c0_i32_1 = arith.constant 0 : i32
    return %c0_i32, %c0_i32_0 : i32, i32
  }
  func.func @transform_8(%arg0: i32) -> (i32, i32) {
    %c0_i32 = arith.constant 0 : i32
    %c0_i32_0 = arith.constant 0 : i32
    %c0_i32_1 = arith.constant 0 : i32
    return %c0_i32, %c0_i32_0 : i32, i32
  }
  func.func @transform_9(%arg0: i32) -> (i32, i32) {
    %c0_i32 = arith.constant 0 : i32
    %c0_i32_0 = arith.constant 0 : i32
    %c0_i32_1 = arith.constant 0 : i32
    return %c0_i32, %c0_i32_0 : i32, i32
  }
  func.func @transform_10(%arg0: i32) -> (i32, i32) {
    %c0_i32 = arith.constant 0 : i32
    %c0_i32_0 = arith.constant 0 : i32
    %c0_i32_1 = arith.constant 0 : i32
    return %c0_i32, %c0_i32_0 : i32, i32
  }
  func.func @transform_11(%arg0: i32) -> (i32, i32) {
    %c0_i32 = arith.constant 0 : i32
    %c0_i32_0 = arith.constant 0 : i32
    %c0_i32_1 = arith.constant 0 : i32
    return %c0_i32, %c0_i32_0 : i32, i32
  }
  func.func @transform_12(%arg0: i32) -> (i32, i32) {
    %c0_i32 = arith.constant 0 : i32
    %c0_i32_0 = arith.constant 0 : i32
    %c0_i32_1 = arith.constant 0 : i32
    return %c0_i32, %c0_i32_0 : i32, i32
  }
  func.func @transform_13(%arg0: i32) -> (i32, i32) {
    %c0_i32 = arith.constant 0 : i32
    %c0_i32_0 = arith.constant 0 : i32
    %c0_i32_1 = arith.constant 0 : i32
    return %c0_i32, %c0_i32_0 : i32, i32
  }
  func.func @transform_14(%arg0: i32) -> (i32, i32) {
    %c0_i32 = arith.constant 0 : i32
    %c0_i32_0 = arith.constant 0 : i32
    %c0_i32_1 = arith.constant 0 : i32
    return %c0_i32, %c0_i32_0 : i32, i32
  }
  func.func @transform_15(%arg0: i32) -> (i32, i32, i32) {
    %c0_i32 = arith.constant 0 : i32
    %c0_i32_0 = arith.constant 0 : i32
    %c0_i32_1 = arith.constant 0 : i32
    return %arg0, %c0_i32, %c0_i32_0 : i32, i32, i32
  }
}

</mosaic_0001>

<llo_original>
// kernel: tpu_custom_call.1
$region0: #{tpu_custom_call.1}
  #allocation0 [shape = 'u32[]', space=smem, size = 0x4, offset = 0x4, fixed_abs, tag = 'smem constant byte address 0x4 - core index']
  #allocation1 [shape = 'u32[144,128]{1,0:T(1,128)}', space=vmem, size = 0x12000, scoped, tag = 'internal scratch']
  %s0 = inlined_call_operand.hbm [shape: bf16[2,128,128], index: 0, kind: input, shape index: {}]
  %s1 = inlined_call_operand.hbm [shape: bf16[2,128,128], index: 1, kind: input, shape index: {}]
  %s2 = inlined_call_operand.vmem [shape: bf16[2,1,128], index: 2, kind: input, shape index: {}]
  %s3 = inlined_call_operand.hbm [shape: bf16[128,128], index: 3, kind: input, shape index: {}]
  %s4 = inlined_call_operand.vmem [shape: f32[1,128], index: 4, kind: input, shape index: {}]
  %s5 = inlined_call_operand.hbm [shape: bf16[128,128], index: 5, kind: input, shape index: {}]
  %s6 = inlined_call_operand.vmem [shape: f32[1,128], index: 6, kind: input, shape index: {}]
  %s7 = inlined_call_operand.hbm [shape: bf16[128,128], index: 7, kind: input, shape index: {}]
  %s8 = inlined_call_operand.vmem [shape: f32[1,128], index: 8, kind: input, shape index: {}]
  %s9 = inlined_call_operand.hbm [shape: bf16[128,128], index: 9, kind: input, shape index: {}]
  %s10 = inlined_call_operand.vmem [shape: f32[1,128], index: 10, kind: input, shape index: {}]
  %s11 = inlined_call_operand.hbm [shape: bf16[128,128], index: 11, kind: input, shape index: {}]
  %s12 = inlined_call_operand.vmem [shape: f32[1,128], index: 12, kind: input, shape index: {}]
  %s13 = inlined_call_operand.hbm [shape: bf16[128,128], index: 13, kind: input, shape index: {}]
  %s14 = inlined_call_operand.vmem [shape: f32[1,128], index: 14, kind: input, shape index: {}]
  %s15 = inlined_call_operand.hbm [shape: f32[2,1,128], index: 15, kind: output, shape index: {}]
  %s16 = sld [smem:[#allocation0]]
  $region125: #{tpu_custom_call.1} parent=0
    _
  %s18 = ssub.s32 1, %s16
  %s19 = scalar_select 0, %s18, %s16
  $region1: #{tpu_custom_call.1} parent=0
    #allocation2 [shape = 'u8[65536]{0}', space=vmem, size = 0x10000, scoped, tag = 'input window, operand 0']
    #allocation3 [shape = 's32[2]{0}', space=sflag, size = 0x8, scoped, tag = 'scoped memory for tpu_custom_call.1']
    #allocation4 [shape = 's32[2]{0}', space=sflag, size = 0x8, scoped, tag = 'scoped memory for tpu_custom_call.1']
    #allocation5 [shape = 'u8[65536]{0}', space=vmem, size = 0x10000, scoped, tag = 'input window, operand 1']
    #allocation6 [shape = 's32[2]{0}', space=sflag, size = 0x8, scoped, tag = 'scoped memory for tpu_custom_call.1']
    #allocation7 [shape = 'u8[32768]{0}', space=vmem, size = 0x8000, scoped, tag = 'input window, operand 3, single buffered']
    #allocation8 [shape = 'u8[32768]{0}', space=vmem, size = 0x8000, scoped, tag = 'input window, operand 5, single buffered']
    #allocation9 [shape = 's32[1]{0}', space=sflag, size = 0x4, scoped, tag = 'scoped memory for tpu_custom_call.1']
    #allocation10 [shape = 'u8[32768]{0}', space=vmem, size = 0x8000, scoped, tag = 'input window, operand 7, single buffered']
    #allocation11 [shape = 'u8[32768]{0}', space=vmem, size = 0x8000, scoped, tag = 'input window, operand 9, single buffered']
    #allocation12 [shape = 's32[1]{0}', space=sflag, size = 0x4, scoped, tag = 'scoped memory for tpu_custom_call.1']
    #allocation13 [shape = 'u8[32768]{0}', space=vmem, size = 0x8000, scoped, tag = 'input window, operand 11, single buffered']
    #allocation14 [shape = 'u8[32768]{0}', space=vmem, size = 0x8000, scoped, tag = 'input window, operand 13, single buffered']
    #allocation15 [shape = 's32[1]{0}', space=sflag, size = 0x4, scoped, tag = 'scoped memory for tpu_custom_call.1']
    #allocation16 [shape = 'u8[1024]{0}', space=vmem, size = 0x400, scoped, tag = 'output window, operand 0']
    %20 = vsyncpa [#allocation3], 0
    %s21 = scalar_lea.sflag [#allocation3], 1
    %22 = vsyncpa %s21, 0
    %23 = vsyncpa [#allocation6], 0
    %s24 = scalar_lea.sflag [#allocation6], 1
    %25 = vsyncpa %s24, 0
    %26 = vsyncpa [#allocation9], 0
    %27 = vsyncpa [#allocation12], 0
    %28 = vsyncpa [#allocation15], 0
    %29 = vsyncpa [#allocation4], 0
    %s30 = scalar_lea.sflag [#allocation4], 1
    %31 = vsyncpa %s30, 0
    loop: start=0, step=1, limit=4
    $region2: #{tpu_custom_call.1} parent=1 // loop_pre_header
      _
    $region3: #{tpu_custom_call.1} parent=1 // loop_header
      %s33 = sphi 0, %s37
      %p34 = scmp.ge.s32.totalorder %s33, 4
      %s43 = sphi 0, %s45
      %s46 = sphi 0, %s43
      %s47 = sphi 0, %s46
      %s63 = sphi 0, %s47
      %s69 = sphi 0, %s71
      %s72 = sphi 0, %s69
      %s73 = sphi 0, %s72
      %s89 = sphi 0, %s73
      %s95 = sphi 0, %s97
      %s98 = sphi 0, %s95
      %s99 = sphi 0, %s98
      %s115 = sphi 0, %s99
      %s119 = sphi 0, %s119
      %s121 = sphi 0, %s119
      %s122 = sphi 0, %s121
      %s136 = sphi 0, %s122
      %s140 = sphi 0, %s140
      %s142 = sphi 0, %s140
      %s143 = sphi 0, %s142
      %s157 = sphi 0, %s143
      %s161 = sphi 0, %s161
      %s163 = sphi 0, %s161
      %s164 = sphi 0, %s163
      %s178 = sphi 0, %s164
      %s182 = sphi 0, %s182
      %s184 = sphi 0, %s182
      %s185 = sphi 0, %s184
      %s199 = sphi 0, %s185
      %s203 = sphi 0, %s203
      %s205 = sphi 0, %s203
      %s206 = sphi 0, %s205
      %s220 = sphi 0, %s206
      %s224 = sphi 0, %s224
      %s226 = sphi 0, %s224
      %s227 = sphi 0, %s226
      %s241 = sphi 0, %s227
      %s245 = sphi 0, %s245
      %s247 = sphi 0, %s245
      %s248 = sphi 0, %s247
      %s262 = sphi 0, %s248
      %s266 = sphi 0, %s266
      %s268 = sphi 0, %s266
      %s269 = sphi 0, %s268
      %s283 = sphi 0, %s269
      %s287 = sphi 0, %s287
      %s289 = sphi 0, %s287
      %s290 = sphi 0, %s289
      %s304 = sphi 0, %s290
      %s308 = sphi 0, %s308
      %s310 = sphi 0, %s308
      %s311 = sphi 0, %s310
      %s325 = sphi 0, %s311
      %s329 = sphi 0, %s329
      %s331 = sphi 0, %s329
      %s332 = sphi 0, %s331
      %s346 = sphi 0, %s332
      %s350 = sphi 0, %s350
      %s352 = sphi 0, %s350
      %s353 = sphi 0, %s352
      %s367 = sphi 0, %s353
      %s373 = sphi 0, %s375
      %s376 = sphi 0, %s373
      %s377 = sphi 0, %s376
      %s393 = sphi 0, %s377
    $region4: #{tpu_custom_call.1} parent=1 // loop_header_branch
      %36 = sbr.rel (%p34) target = $region8
    $region5: #{tpu_custom_call.1} parent=1 // loop_body
      %s38 = ssub.s32 %s33, 1
      %s39 = ssub.s32 %s33, 2
      %s40 = sadd.s32 %s33, 1
      %s41 = ssub.s32 %s33, %s40
      %p42 = scmp.eq.s32.totalorder %s41, 0
      %s44 = sadd.s32 %s43, 1
      %s45 = scalar_select %p42, %s43, %s44
      %p48 = pneg %p42
      %p49 = scmp.eq.s32.totalorder %s33, 1
      %p50 = por %p48, %p49
      %p51 = scmp.ne.s32.totalorder %s43, %s46
      %p52 = scmp.eq.s32.totalorder %s33, 0
      %p53 = por %p51, %p52
      %p54 = scmp.ne.s32.totalorder %s43, %s46
      %p55 = scmp.eq.s32.totalorder %s38, 1
      %p56 = por %p54, %p55
      %p57 = scmp.ne.s32.totalorder %s46, %s47
      %p58 = scmp.eq.s32.totalorder %s38, 0
      %p59 = por %p57, %p58
      %p60 = scmp.ne.s32.totalorder %s46, %s47
      %p61 = scmp.eq.s32.totalorder %s39, 1
      %p62 = por %p60, %p61
      %p64 = scmp.ne.s32.totalorder %s47, %s63
      %p65 = scmp.eq.s32.totalorder %s39, 0
      %p66 = por %p64, %p65
      %s67 = ssub.s32 %s33, %s40
      %p68 = scmp.eq.s32.totalorder %s67, 0
      %s70 = sadd.s32 %s69, 1
      %s71 = scalar_select %p68, %s69, %s70
      %p74 = pneg %p68
      %p75 = scmp.eq.s32.totalorder %s33, 1
      %p76 = por %p74, %p75
      %p77 = scmp.ne.s32.totalorder %s69, %s72
      %p78 = scmp.eq.s32.totalorder %s33, 0
      %p79 = por %p77, %p78
      %p80 = scmp.ne.s32.totalorder %s69, %s72
      %p81 = scmp.eq.s32.totalorder %s38, 1
      %p82 = por %p80, %p81
      %p83 = scmp.ne.s32.totalorder %s72, %s73
      %p84 = scmp.eq.s32.totalorder %s38, 0
      %p85 = por %p83, %p84
      %p86 = scmp.ne.s32.totalorder %s72, %s73
      %p87 = scmp.eq.s32.totalorder %s39, 1
      %p88 = por %p86, %p87
      %p90 = scmp.ne.s32.totalorder %s73, %s89
      %p91 = scmp.eq.s32.totalorder %s39, 0
      %p92 = por %p90, %p91
      %s93 = ssub.s32 %s33, %s40
      %p94 = scmp.eq.s32.totalorder %s93, 0
      %s96 = sadd.s32 %s95, 1
      %s97 = scalar_select %p94, %s95, %s96
      %p100 = pneg %p94
      %p101 = scmp.eq.s32.totalorder %s33, 1
      %p102 = por %p100, %p101
      %p103 = scmp.ne.s32.totalorder %s95, %s98
      %p104 = scmp.eq.s32.totalorder %s33, 0
      %p105 = por %p103, %p104
      %p106 = scmp.ne.s32.totalorder %s95, %s98
      %p107 = scmp.eq.s32.totalorder %s38, 1
      %p108 = por %p106, %p107
      %p109 = scmp.ne.s32.totalorder %s98, %s99
      %p110 = scmp.eq.s32.totalorder %s38, 0
      %p111 = por %p109, %p110
      %p112 = scmp.ne.s32.totalorder %s98, %s99
      %p113 = scmp.eq.s32.totalorder %s39, 1
      %p114 = por %p112, %p113
      %p116 = scmp.ne.s32.totalorder %s99, %s115
      %p117 = scmp.eq.s32.totalorder %s39, 0
      %p118 = por %p116, %p117
      %s120 = sadd.s32 %s119, 1
      %p123 = scmp.eq.s32.totalorder %s33, 1
      %p124 = scmp.ne.s32.totalorder %s119, %s121
      %p125 = scmp.eq.s32.totalorder %s33, 0
      %p126 = por %p124, %p125
      %p127 = scmp.ne.s32.totalorder %s119, %s121
      %p128 = scmp.eq.s32.totalorder %s38, 1
      %p129 = por %p127, %p128
      %p130 = scmp.ne.s32.totalorder %s121, %s122
      %p131 = scmp.eq.s32.totalorder %s38, 0
      %p132 = por %p130, %p131
      %p133 = scmp.ne.s32.totalorder %s121, %s122
      %p134 = scmp.eq.s32.totalorder %s39, 1
      %p135 = por %p133, %p134
      %p137 = scmp.ne.s32.totalorder %s122, %s136
      %p138 = scmp.eq.s32.totalorder %s39, 0
      %p139 = por %p137, %p138
      %s141 = sadd.s32 %s140, 1
      %p144 = scmp.eq.s32.totalorder %s33, 1
      %p145 = scmp.ne.s32.totalorder %s140, %s142
      %p146 = scmp.eq.s32.totalorder %s33, 0
      %p147 = por %p145, %p146
      %p148 = scmp.ne.s32.totalorder %s140, %s142
      %p149 = scmp.eq.s32.totalorder %s38, 1
      %p150 = por %p148, %p149
      %p151 = scmp.ne.s32.totalorder %s142, %s143
      %p152 = scmp.eq.s32.totalorder %s38, 0
      %p153 = por %p151, %p152
      %p154 = scmp.ne.s32.totalorder %s142, %s143
      %p155 = scmp.eq.s32.totalorder %s39, 1
      %p156 = por %p154, %p155
      %p158 = scmp.ne.s32.totalorder %s143, %s157
      %p159 = scmp.eq.s32.totalorder %s39, 0
      %p160 = por %p158, %p159
      %s162 = sadd.s32 %s161, 1
      %p165 = scmp.eq.s32.totalorder %s33, 1
      %p166 = scmp.ne.s32.totalorder %s161, %s163
      %p167 = scmp.eq.s32.totalorder %s33, 0
      %p168 = por %p166, %p167
      %p169 = scmp.ne.s32.totalorder %s161, %s163
      %p170 = scmp.eq.s32.totalorder %s38, 1
      %p171 = por %p169, %p170
      %p172 = scmp.ne.s32.totalorder %s163, %s164
      %p173 = scmp.eq.s32.totalorder %s38, 0
      %p174 = por %p172, %p173
      %p175 = scmp.ne.s32.totalorder %s163, %s164
      %p176 = scmp.eq.s32.totalorder %s39, 1
      %p177 = por %p175, %p176
      %p179 = scmp.ne.s32.totalorder %s164, %s178
      %p180 = scmp.eq.s32.totalorder %s39, 0
      %p181 = por %p179, %p180
      %s183 = sadd.s32 %s182, 1
      %p186 = scmp.eq.s32.totalorder %s33, 1
      %p187 = scmp.ne.s32.totalorder %s182, %s184
      %p188 = scmp.eq.s32.totalorder %s33, 0
      %p189 = por %p187, %p188
      %p190 = scmp.ne.s32.totalorder %s182, %s184
      %p191 = scmp.eq.s32.totalorder %s38, 1
      %p192 = por %p190, %p191
      %p193 = scmp.ne.s32.totalorder %s184, %s185
      %p194 = scmp.eq.s32.totalorder %s38, 0
      %p195 = por %p193, %p194
      %p196 = scmp.ne.s32.totalorder %s184, %s185
      %p197 = scmp.eq.s32.totalorder %s39, 1
      %p198 = por %p196, %p197
      %p200 = scmp.ne.s32.totalorder %s185, %s199
      %p201 = scmp.eq.s32.totalorder %s39, 0
      %p202 = por %p200, %p201
      %s204 = sadd.s32 %s203, 1
      %p207 = scmp.eq.s32.totalorder %s33, 1
      %p208 = scmp.ne.s32.totalorder %s203, %s205
      %p209 = scmp.eq.s32.totalorder %s33, 0
      %p210 = por %p208, %p209
      %p211 = scmp.ne.s32.totalorder %s203, %s205
      %p212 = scmp.eq.s32.totalorder %s38, 1
      %p213 = por %p211, %p212
      %p214 = scmp.ne.s32.totalorder %s205, %s206
      %p215 = scmp.eq.s32.totalorder %s38, 0
      %p216 = por %p214, %p215
      %p217 = scmp.ne.s32.totalorder %s205, %s206
      %p218 = scmp.eq.s32.totalorder %s39, 1
      %p219 = por %p217, %p218
      %p221 = scmp.ne.s32.totalorder %s206, %s220
      %p222 = scmp.eq.s32.totalorder %s39, 0
      %p223 = por %p221, %p222
      %s225 = sadd.s32 %s224, 1
      %p228 = scmp.eq.s32.totalorder %s33, 1
      %p229 = scmp.ne.s32.totalorder %s224, %s226
      %p230 = scmp.eq.s32.totalorder %s33, 0
      %p231 = por %p229, %p230
      %p232 = scmp.ne.s32.totalorder %s224, %s226
      %p233 = scmp.eq.s32.totalorder %s38, 1
      %p234 = por %p232, %p233
      %p235 = scmp.ne.s32.totalorder %s226, %s227
      %p236 = scmp.eq.s32.totalorder %s38, 0
      %p237 = por %p235, %p236
      %p238 = scmp.ne.s32.totalorder %s226, %s227
      %p239 = scmp.eq.s32.totalorder %s39, 1
      %p240 = por %p238, %p239
      %p242 = scmp.ne.s32.totalorder %s227, %s241
      %p243 = scmp.eq.s32.totalorder %s39, 0
      %p244 = por %p242, %p243
      %s246 = sadd.s32 %s245, 1
      %p249 = scmp.eq.s32.totalorder %s33, 1
      %p250 = scmp.ne.s32.totalorder %s245, %s247
      %p251 = scmp.eq.s32.totalorder %s33, 0
      %p252 = por %p250, %p251
      %p253 = scmp.ne.s32.totalorder %s245, %s247
      %p254 = scmp.eq.s32.totalorder %s38, 1
      %p255 = por %p253, %p254
      %p256 = scmp.ne.s32.totalorder %s247, %s248
      %p257 = scmp.eq.s32.totalorder %s38, 0
      %p258 = por %p256, %p257
      %p259 = scmp.ne.s32.totalorder %s247, %s248
      %p260 = scmp.eq.s32.totalorder %s39, 1
      %p261 = por %p259, %p260
      %p263 = scmp.ne.s32.totalorder %s248, %s262
      %p264 = scmp.eq.s32.totalorder %s39, 0
      %p265 = por %p263, %p264
      %s267 = sadd.s32 %s266, 1
      %p270 = scmp.eq.s32.totalorder %s33, 1
      %p271 = scmp.ne.s32.totalorder %s266, %s268
      %p272 = scmp.eq.s32.totalorder %s33, 0
      %p273 = por %p271, %p272
      %p274 = scmp.ne.s32.totalorder %s266, %s268
      %p275 = scmp.eq.s32.totalorder %s38, 1
      %p276 = por %p274, %p275
      %p277 = scmp.ne.s32.totalorder %s268, %s269
      %p278 = scmp.eq.s32.totalorder %s38, 0
      %p279 = por %p277, %p278
      %p280 = scmp.ne.s32.totalorder %s268, %s269
      %p281 = scmp.eq.s32.totalorder %s39, 1
      %p282 = por %p280, %p281
      %p284 = scmp.ne.s32.totalorder %s269, %s283
      %p285 = scmp.eq.s32.totalorder %s39, 0
      %p286 = por %p284, %p285
      %s288 = sadd.s32 %s287, 1
      %p291 = scmp.eq.s32.totalorder %s33, 1
      %p292 = scmp.ne.s32.totalorder %s287, %s289
      %p293 = scmp.eq.s32.totalorder %s33, 0
      %p294 = por %p292, %p293
      %p295 = scmp.ne.s32.totalorder %s287, %s289
      %p296 = scmp.eq.s32.totalorder %s38, 1
      %p297 = por %p295, %p296
      %p298 = scmp.ne.s32.totalorder %s289, %s290
      %p299 = scmp.eq.s32.totalorder %s38, 0
      %p300 = por %p298, %p299
      %p301 = scmp.ne.s32.totalorder %s289, %s290
      %p302 = scmp.eq.s32.totalorder %s39, 1
      %p303 = por %p301, %p302
      %p305 = scmp.ne.s32.totalorder %s290, %s304
      %p306 = scmp.eq.s32.totalorder %s39, 0
      %p307 = por %p305, %p306
      %s309 = sadd.s32 %s308, 1
      %p312 = scmp.eq.s32.totalorder %s33, 1
      %p313 = scmp.ne.s32.totalorder %s308, %s310
      %p314 = scmp.eq.s32.totalorder %s33, 0
      %p315 = por %p313, %p314
      %p316 = scmp.ne.s32.totalorder %s308, %s310
      %p317 = scmp.eq.s32.totalorder %s38, 1
      %p318 = por %p316, %p317
      %p319 = scmp.ne.s32.totalorder %s310, %s311
      %p320 = scmp.eq.s32.totalorder %s38, 0
      %p321 = por %p319, %p320
      %p322 = scmp.ne.s32.totalorder %s310, %s311
      %p323 = scmp.eq.s32.totalorder %s39, 1
      %p324 = por %p322, %p323
      %p326 = scmp.ne.s32.totalorder %s311, %s325
      %p327 = scmp.eq.s32.totalorder %s39, 0
      %p328 = por %p326, %p327
      %s330 = sadd.s32 %s329, 1
      %p333 = scmp.eq.s32.totalorder %s33, 1
      %p334 = scmp.ne.s32.totalorder %s329, %s331
      %p335 = scmp.eq.s32.totalorder %s33, 0
      %p336 = por %p334, %p335
      %p337 = scmp.ne.s32.totalorder %s329, %s331
      %p338 = scmp.eq.s32.totalorder %s38, 1
      %p339 = por %p337, %p338
      %p340 = scmp.ne.s32.totalorder %s331, %s332
      %p341 = scmp.eq.s32.totalorder %s38, 0
      %p342 = por %p340, %p341
      %p343 = scmp.ne.s32.totalorder %s331, %s332
      %p344 = scmp.eq.s32.totalorder %s39, 1
      %p345 = por %p343, %p344
      %p347 = scmp.ne.s32.totalorder %s332, %s346
      %p348 = scmp.eq.s32.totalorder %s39, 0
      %p349 = por %p347, %p348
      %s351 = sadd.s32 %s350, 1
      %p354 = scmp.eq.s32.totalorder %s33, 1
      %p355 = scmp.ne.s32.totalorder %s350, %s352
      %p356 = scmp.eq.s32.totalorder %s33, 0
      %p357 = por %p355, %p356
      %p358 = scmp.ne.s32.totalorder %s350, %s352
      %p359 = scmp.eq.s32.totalorder %s38, 1
      %p360 = por %p358, %p359
      %p361 = scmp.ne.s32.totalorder %s352, %s353
      %p362 = scmp.eq.s32.totalorder %s38, 0
      %p363 = por %p361, %p362
      %p364 = scmp.ne.s32.totalorder %s352, %s353
      %p365 = scmp.eq.s32.totalorder %s39, 1
      %p366 = por %p364, %p365
      %p368 = scmp.ne.s32.totalorder %s353, %s367
      %p369 = scmp.eq.s32.totalorder %s39, 0
      %p370 = por %p368, %p369
      %s371 = ssub.s32 %s33, %s40
      %p372 = scmp.eq.s32.totalorder %s371, 0
      %s374 = sadd.s32 %s373, 1
      %s375 = scalar_select %p372, %s373, %s374
      %p378 = pneg %p372
      %p379 = scmp.eq.s32.totalorder %s33, 1
      %p380 = por %p378, %p379
      %p381 = scmp.ne.s32.totalorder %s373, %s376
      %p382 = scmp.eq.s32.totalorder %s33, 0
      %p383 = por %p381, %p382
      %p384 = scmp.ne.s32.totalorder %s373, %s376
      %p385 = scmp.eq.s32.totalorder %s38, 1
      %p386 = por %p384, %p385
      %p387 = scmp.ne.s32.totalorder %s376, %s377
      %p388 = scmp.eq.s32.totalorder %s38, 0
      %p389 = por %p387, %p388
      %p390 = scmp.ne.s32.totalorder %s376, %s377
      %p391 = scmp.eq.s32.totalorder %s39, 1
      %p392 = por %p390, %p391
      %p394 = scmp.ne.s32.totalorder %s377, %s393
      %p395 = scmp.eq.s32.totalorder %s39, 0
      %p396 = por %p394, %p395
      %p397 = scmp.le.s32.totalorder 1, %s33
      %p398 = scmp.lt.s32.totalorder %s33, 3
      %p399 = pnand %p397, %p398
      %p400 = pneg %p399
      // Predicated region
      $region9: #{tpu_custom_call.1} parent=5 // pred_check
        _
      $region10: #{tpu_custom_call.1} parent=5 // pred_check_branch
        %402 = sbr.rel (%p399) target = $region12
      $region11: #{tpu_custom_call.1} parent=5 // pred_region
        %s403 = ssub.s32 %s33, 1
        // Predicated region
        $region13: #{tpu_custom_call.1} parent=11 // pred_check
          %p404 = pneg %p132
        $region14: #{tpu_custom_call.1} parent=11 // pred_check_branch
          %406 = sbr.rel (%p404) target = $region16
        $region15: #{tpu_custom_call.1} parent=11 // pred_region
          %s408 = ssub.s32 1024, 1024
          %409 = vsyncadd [#allocation6], %s408
          %s410 = sshll.u32 [#allocation7], 4
          %s411 = int_to_ptr.vmem [resolvable:$true] %s410
          %416 = dma.hbm_to_vmem [thread:$0]  %s3, 1024, %s411, [#allocation6], 64, 64, 4
        $region16: #{tpu_custom_call.1} parent=11 // pred_fallthru
          _
        // Predicated region
        $region17: #{tpu_custom_call.1} parent=11 // pred_check
          %p417 = pneg %p153
        $region18: #{tpu_custom_call.1} parent=11 // pred_check_branch
          %419 = sbr.rel (%p417) target = $region20
        $region19: #{tpu_custom_call.1} parent=11 // pred_region
          _
        $region20: #{tpu_custom_call.1} parent=11 // pred_fallthru
          _
        // Predicated region
        $region21: #{tpu_custom_call.1} parent=11 // pred_check
          %p420 = pneg %p174
        $region22: #{tpu_custom_call.1} parent=11 // pred_check_branch
          %422 = sbr.rel (%p420) target = $region24
        $region23: #{tpu_custom_call.1} parent=11 // pred_region
          %s424 = ssub.s32 1024, 1024
          %425 = vsyncadd [#allocation9], %s424
          %s426 = sshll.u32 [#allocation8], 4
          %s427 = int_to_ptr.vmem [resolvable:$true] %s426
          %432 = dma.hbm_to_vmem [thread:$0]  %s5, 1024, %s427, [#allocation9], 64, 64, 4
        $region24: #{tpu_custom_call.1} parent=11 // pred_fallthru
          _
        // Predicated region
        $region25: #{tpu_custom_call.1} parent=11 // pred_check
          %p433 = pneg %p195
        $region26: #{tpu_custom_call.1} parent=11 // pred_check_branch
          %435 = sbr.rel (%p433) target = $region28
        $region27: #{tpu_custom_call.1} parent=11 // pred_region
          _
        $region28: #{tpu_custom_call.1} parent=11 // pred_fallthru
          _
        // Predicated region
        $region29: #{tpu_custom_call.1} parent=11 // pred_check
          %p436 = pneg %p216
        $region30: #{tpu_custom_call.1} parent=11 // pred_check_branch
          %438 = sbr.rel (%p436) target = $region32
        $region31: #{tpu_custom_call.1} parent=11 // pred_region
          %s440 = ssub.s32 1024, 1024
          %441 = vsyncadd [#allocation9], %s440
          %s442 = sshll.u32 [#allocation10], 4
          %s443 = int_to_ptr.vmem [resolvable:$true] %s442
          %448 = dma.hbm_to_vmem [thread:$0]  %s7, 1024, %s443, [#allocation9], 64, 64, 4
        $region32: #{tpu_custom_call.1} parent=11 // pred_fallthru
          _
        // Predicated region
        $region33: #{tpu_custom_call.1} parent=11 // pred_check
          %p449 = pneg %p237
        $region34: #{tpu_custom_call.1} parent=11 // pred_check_branch
          %451 = sbr.rel (%p449) target = $region36
        $region35: #{tpu_custom_call.1} parent=11 // pred_region
          _
        $region36: #{tpu_custom_call.1} parent=11 // pred_fallthru
          _
        // Predicated region
        $region37: #{tpu_custom_call.1} parent=11 // pred_check
          %p452 = pneg %p258
        $region38: #{tpu_custom_call.1} parent=11 // pred_check_branch
          %454 = sbr.rel (%p452) target = $region40
        $region39: #{tpu_custom_call.1} parent=11 // pred_region
          %s456 = ssub.s32 1024, 1024
          %457 = vsyncadd [#allocation12], %s456
          %s458 = sshll.u32 [#allocation11], 4
          %s459 = int_to_ptr.vmem [resolvable:$true] %s458
          %464 = dma.hbm_to_vmem [thread:$0]  %s9, 1024, %s459, [#allocation12], 64, 64, 4
        $region40: #{tpu_custom_call.1} parent=11 // pred_fallthru
          _
        // Predicated region
        $region41: #{tpu_custom_call.1} parent=11 // pred_check
          %p465 = pneg %p279
        $region42: #{tpu_custom_call.1} parent=11 // pred_check_branch
          %467 = sbr.rel (%p465) target = $region44
        $region43: #{tpu_custom_call.1} parent=11 // pred_region
          _
        $region44: #{tpu_custom_call.1} parent=11 // pred_fallthru
          _
        // Predicated region
        $region45: #{tpu_custom_call.1} parent=11 // pred_check
          %p468 = pneg %p300
        $region46: #{tpu_custom_call.1} parent=11 // pred_check_branch
          %470 = sbr.rel (%p468) target = $region48
        $region47: #{tpu_custom_call.1} parent=11 // pred_region
          %s472 = ssub.s32 1024, 1024
          %473 = vsyncadd [#allocation12], %s472
          %s474 = sshll.u32 [#allocation13], 4
          %s475 = int_to_ptr.vmem [resolvable:$true] %s474
          %480 = dma.hbm_to_vmem [thread:$0]  %s11, 1024, %s475, [#allocation12], 64, 64, 4
        $region48: #{tpu_custom_call.1} parent=11 // pred_fallthru
          _
        // Predicated region
        $region49: #{tpu_custom_call.1} parent=11 // pred_check
          %p481 = pneg %p321
        $region50: #{tpu_custom_call.1} parent=11 // pred_check_branch
          %483 = sbr.rel (%p481) target = $region52
        $region51: #{tpu_custom_call.1} parent=11 // pred_region
          _
        $region52: #{tpu_custom_call.1} parent=11 // pred_fallthru
          _
        // Predicated region
        $region53: #{tpu_custom_call.1} parent=11 // pred_check
          %p484 = pneg %p342
        $region54: #{tpu_custom_call.1} parent=11 // pred_check_branch
          %486 = sbr.rel (%p484) target = $region56
        $region55: #{tpu_custom_call.1} parent=11 // pred_region
          %s488 = ssub.s32 1024, 1024
          %489 = vsyncadd [#allocation15], %s488
          %s490 = sshll.u32 [#allocation14], 4
          %s491 = int_to_ptr.vmem [resolvable:$true] %s490
          %496 = dma.hbm_to_vmem [thread:$0]  %s13, 1024, %s491, [#allocation15], 64, 64, 4
        $region56: #{tpu_custom_call.1} parent=11 // pred_fallthru
          _
        // Predicated region
        $region57: #{tpu_custom_call.1} parent=11 // pred_check
          %p497 = pneg %p363
        $region58: #{tpu_custom_call.1} parent=11 // pred_check_branch
          %499 = sbr.rel (%p497) target = $region60
        $region59: #{tpu_custom_call.1} parent=11 // pred_region
          _
        $region60: #{tpu_custom_call.1} parent=11 // pred_fallthru
          _
      $region12: #{tpu_custom_call.1} parent=5 // pred_fallthru
        _
      %p500 = scmp.lt.s32.totalorder %s33, 2
      // Predicated region
      $region61: #{tpu_custom_call.1} parent=5 // pred_check
        %p501 = pneg %p500
      $region62: #{tpu_custom_call.1} parent=5 // pred_check_branch
        %503 = sbr.rel (%p501) target = $region64
      $region63: #{tpu_custom_call.1} parent=5 // pred_region
        // Predicated region
        $region65: #{tpu_custom_call.1} parent=63 // pred_check
          %p504 = pneg %p53
        $region66: #{tpu_custom_call.1} parent=63 // pred_check_branch
          %506 = sbr.rel (%p504) target = $region68
        $region67: #{tpu_custom_call.1} parent=63 // pred_region
          %s507 = sand.u32 %s43, 1
          %s508 = scalar_lea.sflag [#allocation3], %s507
          %s509 = sand.u32 %s43, 1
          %s510 = smul.addr %s509, 64
          %s511 = scalar_lea.vmem [#allocation2], %s510
          %s513 = ssub.s32 1024, 1024
          %514 = vsyncadd %s508, %s513
          %s515 = smul.addr %s33, 16
          %s516 = smul.addr %s515, 64
          %s517 = scalar_lea.hbm %s0, %s516
          %s518 = sshll.u32 %s511, 4
          %s519 = int_to_ptr.vmem [resolvable:$true] %s518
          %524 = dma.hbm_to_vmem [thread:$0]  %s517, 1024, %s519, %s508, 64, 64, 4
        $region68: #{tpu_custom_call.1} parent=63 // pred_fallthru
          _
        // Predicated region
        $region69: #{tpu_custom_call.1} parent=63 // pred_check
          %p525 = pneg %p79
        $region70: #{tpu_custom_call.1} parent=63 // pred_check_branch
          %527 = sbr.rel (%p525) target = $region72
        $region71: #{tpu_custom_call.1} parent=63 // pred_region
          %s528 = sand.u32 %s33, 1
          %s529 = scalar_lea.sflag [#allocation6], %s528
          %s530 = sand.u32 %s69, 1
          %s531 = smul.addr %s530, 64
          %s532 = scalar_lea.vmem [#allocation5], %s531
          %s534 = ssub.s32 1024, 1024
          %535 = vsyncadd %s529, %s534
          %s536 = smul.addr %s33, 16
          %s537 = smul.addr %s536, 64
          %s538 = scalar_lea.hbm %s1, %s537
          %s539 = sshll.u32 %s532, 4
          %s540 = int_to_ptr.vmem [resolvable:$true] %s539
          %545 = dma.hbm_to_vmem [thread:$0]  %s538, 1024, %s540, %s529, 64, 64, 4
        $region72: #{tpu_custom_call.1} parent=63 // pred_fallthru
          _
        // Predicated region
        $region73: #{tpu_custom_call.1} parent=63 // pred_check
          %p546 = pneg %p105
        $region74: #{tpu_custom_call.1} parent=63 // pred_check_branch
          %548 = sbr.rel (%p546) target = $region76
        $region75: #{tpu_custom_call.1} parent=63 // pred_region
          %p549 = scmp.lt.s32.totalorder %s33, 1
          %s550 = scalar_select %p549, %s33, 1
          %s551 = scalar_lea.vmem %s2, %s550
        $region76: #{tpu_custom_call.1} parent=63 // pred_fallthru
          _
      $region64: #{tpu_custom_call.1} parent=5 // pred_fallthru
        _
      %p552 = scmp.le.s32.totalorder 1, %s33
      %p553 = scmp.lt.s32.totalorder %s33, 3
      %p554 = pnand %p552, %p553
      %p555 = pneg %p554
      // Predicated region
      $region77: #{tpu_custom_call.1} parent=5 // pred_check
        _
      $region78: #{tpu_custom_call.1} parent=5 // pred_check_branch
        %557 = sbr.rel (%p554) target = $region80
      $region79: #{tpu_custom_call.1} parent=5 // pred_region
        %s558 = ssub.s32 %s33, 1
        %s559 = sand.u32 %s46, 1
        %s560 = scalar_lea.sflag [#allocation3], %s559
        %s561 = sand.u32 %s46, 1
        %s562 = smul.addr %s561, 64
        %s563 = scalar_lea.vmem [#allocation2], %s562
        // Predicated region
        $region81: #{tpu_custom_call.1} parent=79 // pred_check
          %p564 = pneg %p59
        $region82: #{tpu_custom_call.1} parent=79 // pred_check_branch
          %566 = sbr.rel (%p564) target = $region84
        $region83: #{tpu_custom_call.1} parent=79 // pred_region
          %567 = dma.done %s560, 1024
        $region84: #{tpu_custom_call.1} parent=79 // pred_fallthru
          _
        %s568 = sand.u32 %s38, 1
        %s569 = scalar_lea.sflag [#allocation6], %s568
        %s570 = sand.u32 %s72, 1
        %s571 = smul.addr %s570, 64
        %s572 = scalar_lea.vmem [#allocation5], %s571
        // Predicated region
        $region85: #{tpu_custom_call.1} parent=79 // pred_check
          %p573 = pneg %p85
        $region86: #{tpu_custom_call.1} parent=79 // pred_check_branch
          %575 = sbr.rel (%p573) target = $region88
        $region87: #{tpu_custom_call.1} parent=79 // pred_region
          %576 = dma.done %s569, 1024
        $region88: #{tpu_custom_call.1} parent=79 // pred_fallthru
          _
        // Predicated region
        $region89: #{tpu_custom_call.1} parent=79 // pred_check
          %p577 = pneg %p132
        $region90: #{tpu_custom_call.1} parent=79 // pred_check_branch
          %579 = sbr.rel (%p577) target = $region92
        $region91: #{tpu_custom_call.1} parent=79 // pred_region
          %580 = dma.done [#allocation6], 1024
        $region92: #{tpu_custom_call.1} parent=79 // pred_fallthru
          _
        // Predicated region
        $region93: #{tpu_custom_call.1} parent=79 // pred_check
          %p581 = pneg %p174
        $region94: #{tpu_custom_call.1} parent=79 // pred_check_branch
          %583 = sbr.rel (%p581) target = $region96
        $region95: #{tpu_custom_call.1} parent=79 // pred_region
          %584 = dma.done [#allocation9], 1024
        $region96: #{tpu_custom_call.1} parent=79 // pred_fallthru
          _
        // Predicated region
        $region97: #{tpu_custom_call.1} parent=79 // pred_check
          %p585 = pneg %p216
        $region98: #{tpu_custom_call.1} parent=79 // pred_check_branch
          %587 = sbr.rel (%p585) target = $region100
        $region99: #{tpu_custom_call.1} parent=79 // pred_region
          %588 = dma.done [#allocation9], 1024
        $region100: #{tpu_custom_call.1} parent=79 // pred_fallthru
          _
        // Predicated region
        $region101: #{tpu_custom_call.1} parent=79 // pred_check
          %p589 = pneg %p258
        $region102: #{tpu_custom_call.1} parent=79 // pred_check_branch
          %591 = sbr.rel (%p589) target = $region104
        $region103: #{tpu_custom_call.1} parent=79 // pred_region
          %592 = dma.done [#allocation12], 1024
        $region104: #{tpu_custom_call.1} parent=79 // pred_fallthru
          _
        // Predicated region
        $region105: #{tpu_custom_call.1} parent=79 // pred_check
          %p593 = pneg %p300
        $region106: #{tpu_custom_call.1} parent=79 // pred_check_branch
          %595 = sbr.rel (%p593) target = $region108
        $region107: #{tpu_custom_call.1} parent=79 // pred_region
          %596 = dma.done [#allocation12], 1024
        $region108: #{tpu_custom_call.1} parent=79 // pred_fallthru
          _
        // Predicated region
        $region109: #{tpu_custom_call.1} parent=79 // pred_check
          %p597 = pneg %p342
        $region110: #{tpu_custom_call.1} parent=79 // pred_check_branch
          %599 = sbr.rel (%p597) target = $region112
        $region111: #{tpu_custom_call.1} parent=79 // pred_region
          %600 = dma.done [#allocation15], 1024
        $region112: #{tpu_custom_call.1} parent=79 // pred_fallthru
          _
        %s601 = sand.u32 %s46, 1
        %s602 = scalar_lea.sflag [#allocation3], %s601
        %s603 = sand.u32 %s46, 1
        %s604 = smul.addr %s603, 64
        %s605 = scalar_lea.vmem [#allocation2], %s604
        %p606 = pneg %p59
        %p607 = pneg %p56
        %s608 = sand.u32 %s38, 1
        %s609 = scalar_lea.sflag [#allocation6], %s608
        %s610 = sand.u32 %s72, 1
        %s611 = smul.addr %s610, 64
        %s612 = scalar_lea.vmem [#allocation5], %s611
        %p613 = pneg %p85
        %p614 = pneg %p82
        %p615 = scmp.lt.s32.totalorder %s38, 1
        %s616 = scalar_select %p615, %s38, 1
        %s617 = scalar_lea.vmem %s2, %s616
        %p618 = pneg %p111
        %p619 = pneg %p108
        %p620 = pneg %p132
        %p621 = pneg %p129
        %p622 = pneg %p153
        %p623 = pneg %p150
        %p624 = pneg %p174
        %p625 = pneg %p171
        %p626 = pneg %p195
        %p627 = pneg %p192
        %p628 = pneg %p216
        %p629 = pneg %p213
        %p630 = pneg %p237
        %p631 = pneg %p234
        %p632 = pneg %p258
        %p633 = pneg %p255
        %p634 = pneg %p279
        %p635 = pneg %p276
        %p636 = pneg %p300
        %p637 = pneg %p297
        %p638 = pneg %p321
        %p639 = pneg %p318
        %p640 = pneg %p342
        %p641 = pneg %p339
        %p642 = pneg %p363
        %p643 = pneg %p360
        %p644 = pneg %p389
        %p645 = pneg %p386
        %s646 = sand.u32 %s376, 1
        %s647 = scalar_lea.sflag [#allocation4], %s646
        %s648 = sand.u32 %s376, 1
        %s649 = scalar_lea.vmem [#allocation16], %s648
        %p650 = scmp.lt.s32.totalorder %s38, 1
        %s651 = scalar_select %p650, %s38, 1
        %s652 = scalar_lea.vmem %s2, %s651
        %v654 = vld [vmem:[%s563] sm:$0xf]
        %v655 = vld [vmem:[%s563 + $0x4] sm:$0xf]
        %v656 = vld [vmem:[%s563 + $0x8] sm:$0xf]
        %v657 = vld [vmem:[%s563 + $0xc] sm:$0xf]
        %v658 = vld [vmem:[%s563 + $0x10] sm:$0xf]
        %v659 = vld [vmem:[%s563 + $0x14] sm:$0xf]
        %v660 = vld [vmem:[%s563 + $0x18] sm:$0xf]
        %v661 = vld [vmem:[%s563 + $0x1c] sm:$0xf]
        %v662 = vld [vmem:[%s563 + $0x20] sm:$0xf]
        %v663 = vld [vmem:[%s563 + $0x24] sm:$0xf]
        %v664 = vld [vmem:[%s563 + $0x28] sm:$0xf]
        %v665 = vld [vmem:[%s563 + $0x2c] sm:$0xf]
        %v666 = vld [vmem:[%s563 + $0x30] sm:$0xf]
        %v667 = vld [vmem:[%s563 + $0x34] sm:$0xf]
        %v668 = vld [vmem:[%s563 + $0x38] sm:$0xf]
        %v669 = vld [vmem:[%s563 + $0x3c] sm:$0xf]
        %v670 = vld [vmem:[%s572] sm:$0xf]
        %v671 = vld [vmem:[%s572 + $0x4] sm:$0xf]
        %v672 = vld [vmem:[%s572 + $0x8] sm:$0xf]
        %v673 = vld [vmem:[%s572 + $0xc] sm:$0xf]
        %v674 = vld [vmem:[%s572 + $0x10] sm:$0xf]
        %v675 = vld [vmem:[%s572 + $0x14] sm:$0xf]
        %v676 = vld [vmem:[%s572 + $0x18] sm:$0xf]
        %v677 = vld [vmem:[%s572 + $0x1c] sm:$0xf]
        %v678 = vld [vmem:[%s572 + $0x20] sm:$0xf]
        %v679 = vld [vmem:[%s572 + $0x24] sm:$0xf]
        %v680 = vld [vmem:[%s572 + $0x28] sm:$0xf]
        %v681 = vld [vmem:[%s572 + $0x2c] sm:$0xf]
        %v682 = vld [vmem:[%s572 + $0x30] sm:$0xf]
        %v683 = vld [vmem:[%s572 + $0x34] sm:$0xf]
        %v684 = vld [vmem:[%s572 + $0x38] sm:$0xf]
        %v685 = vld [vmem:[%s572 + $0x3c] sm:$0xf]
        %v686 = vld [vmem:[#allocation7] sm:$0xf]
        %v687 = vld [vmem:[#allocation7 + $0x4] sm:$0xf]
        %v688 = vld [vmem:[#allocation7 + $0x8] sm:$0xf]
        %v689 = vld [vmem:[#allocation7 + $0xc] sm:$0xf]
        %v690 = vld [vmem:[#allocation7 + $0x10] sm:$0xf]
        %v691 = vld [vmem:[#allocation7 + $0x14] sm:$0xf]
        %v692 = vld [vmem:[#allocation7 + $0x18] sm:$0xf]
        %v693 = vld [vmem:[#allocation7 + $0x1c] sm:$0xf]
        %v694 = vld [vmem:[#allocation7 + $0x20] sm:$0xf]
        %v695 = vld [vmem:[#allocation7 + $0x24] sm:$0xf]
        %v696 = vld [vmem:[#allocation7 + $0x28] sm:$0xf]
        %v697 = vld [vmem:[#allocation7 + $0x2c] sm:$0xf]
        %v698 = vld [vmem:[#allocation7 + $0x30] sm:$0xf]
        %v699 = vld [vmem:[#allocation7 + $0x34] sm:$0xf]
        %v700 = vld [vmem:[#allocation7 + $0x38] sm:$0xf]
        %v701 = vld [vmem:[#allocation7 + $0x3c] sm:$0xf]
        %v702 = vld [vmem:[%s4] sm:$0x1]
        %v703 = vld [vmem:[#allocation8] sm:$0xf]
        %v704 = vld [vmem:[#allocation8 + $0x4] sm:$0xf]
        %v705 = vld [vmem:[#allocation8 + $0x8] sm:$0xf]
        %v706 = vld [vmem:[#allocation8 + $0xc] sm:$0xf]
        %v707 = vld [vmem:[#allocation8 + $0x10] sm:$0xf]
        %v708 = vld [vmem:[#allocation8 + $0x14] sm:$0xf]
        %v709 = vld [vmem:[#allocation8 + $0x18] sm:$0xf]
        %v710 = vld [vmem:[#allocation8 + $0x1c] sm:$0xf]
        %v711 = vld [vmem:[#allocation8 + $0x20] sm:$0xf]
        %v712 = vld [vmem:[#allocation8 + $0x24] sm:$0xf]
        %v713 = vld [vmem:[#allocation8 + $0x28] sm:$0xf]
        %v714 = vld [vmem:[#allocation8 + $0x2c] sm:$0xf]
        %v715 = vld [vmem:[#allocation8 + $0x30] sm:$0xf]
        %v716 = vld [vmem:[#allocation8 + $0x34] sm:$0xf]
        %v717 = vld [vmem:[#allocation8 + $0x38] sm:$0xf]
        %v718 = vld [vmem:[#allocation8 + $0x3c] sm:$0xf]
        %v719 = vld [vmem:[%s6] sm:$0x1]
        %v736 = vunpack.c.l.b16 %v654
        %v737 = vunpack.c.l.b16 %v655
        %v738 = vunpack.c.l.b16 %v656
        %v739 = vunpack.c.l.b16 %v657
        %v740 = vunpack.c.l.b16 %v658
        %v741 = vunpack.c.l.b16 %v659
        %v742 = vunpack.c.l.b16 %v660
        %v743 = vunpack.c.l.b16 %v661
        %v744 = vunpack.c.l.b16 %v662
        %v745 = vunpack.c.l.b16 %v663
        %v746 = vunpack.c.l.b16 %v664
        %v747 = vunpack.c.l.b16 %v665
        %v748 = vunpack.c.l.b16 %v666
        %v749 = vunpack.c.l.b16 %v667
        %v750 = vunpack.c.l.b16 %v668
        %v751 = vunpack.c.l.b16 %v669
        %v752 = vpack.c.b16 %v737, %v736
        %v753 = vpack.c.b16 %v739, %v738
        %v754 = vpack.c.b16 %v741, %v740
        %v755 = vpack.c.b16 %v743, %v742
        %v756 = vpack.c.b16 %v745, %v744
        %v757 = vpack.c.b16 %v747, %v746
        %v758 = vpack.c.b16 %v749, %v748
        %v759 = vpack.c.b16 %v751, %v750
        %v784 = vunpack.c.l.b16 %v670
        %v785 = vunpack.c.l.b16 %v671
        %v786 = vunpack.c.l.b16 %v672
        %v787 = vunpack.c.l.b16 %v673
        %v788 = vunpack.c.l.b16 %v674
        %v789 = vunpack.c.l.b16 %v675
        %v790 = vunpack.c.l.b16 %v676
        %v791 = vunpack.c.l.b16 %v677
        %v792 = vunpack.c.l.b16 %v678
        %v793 = vunpack.c.l.b16 %v679
        %v794 = vunpack.c.l.b16 %v680
        %v795 = vunpack.c.l.b16 %v681
        %v796 = vunpack.c.l.b16 %v682
        %v797 = vunpack.c.l.b16 %v683
        %v798 = vunpack.c.l.b16 %v684
        %v799 = vunpack.c.l.b16 %v685
        %v800 = vpack.c.b16 %v785, %v784
        %v801 = vpack.c.b16 %v787, %v786
        %v802 = vpack.c.b16 %v789, %v788
        %v803 = vpack.c.b16 %v791, %v790
        %v804 = vpack.c.b16 %v793, %v792
        %v805 = vpack.c.b16 %v795, %v794
        %v806 = vpack.c.b16 %v797, %v796
        %v807 = vpack.c.b16 %v799, %v798
        %816 = vmatprep.subr.bf16.mxu0 0
        %817 = vmatpush1.bf16.msra.mxu0 %v807
        %818 = vmatprep.subr.bf16.mxu0 0
        %819 = vmatpush1.bf16.msra.mxu0 %v806
        %820 = vmatprep.subr.bf16.mxu0 0
        %821 = vmatpush1.bf16.msra.mxu0 %v805
        %822 = vmatprep.subr.bf16.mxu0 0
        %823 = vmatpush1.bf16.msra.mxu0 %v804
        %824 = vmatprep.subr.bf16.mxu0 0
        %825 = vmatpush1.bf16.msra.mxu0 %v803
        %826 = vmatprep.subr.bf16.mxu0 0
        %827 = vmatpush1.bf16.msra.mxu0 %v802
        %828 = vmatprep.subr.bf16.mxu0 0
        %829 = vmatpush1.bf16.msra.mxu0 %v801
        %830 = vmatprep.subr.bf16.mxu0 0
        %831 = vmatpush1.bf16.msra.mxu0 %v800
        %832 = vmatprep.subr.bf16.mxu0 0
        %833 = vmatpush2.bf16.msra.mxu0 0
        %834 = vmatprep.subr.bf16.mxu0 0
        %835 = vmatpush2.bf16.msra.mxu0 0
        %836 = vmatprep.subr.bf16.mxu0 0
        %837 = vmatpush2.bf16.msra.mxu0 0
        %838 = vmatprep.subr.bf16.mxu0 0
        %839 = vmatpush2.bf16.msra.mxu0 0
        %840 = vmatprep.subr.bf16.mxu0 0
        %841 = vmatpush2.bf16.msra.mxu0 0
        %842 = vmatprep.subr.bf16.mxu0 0
        %843 = vmatpush2.bf16.msra.mxu0 0
        %844 = vmatprep.subr.bf16.mxu0 0
        %845 = vmatpush2.bf16.msra.mxu0 0
        %846 = vmatprep.subr.bf16.mxu0 0
        %847 = vmatpush2.bf16.msra.mxu0 0
        %848 = vmatprep.mubr.bf16.mxu0 0
        %849 = vmatmul.mubr.bf16.gmra.mxu0 %v752
        %v850 = vpop.f32.mrf.mxu0
        %v851 = vadd.f32 0.0, %v850
        %v852 = vpop.f32.mrf.mxu0
        %v853 = vpop.f32.mrf.mxu0
        %v854 = vadd.f32 0.0, %v853
        %v855 = vpop.f32.mrf.mxu0
        %856 = vmatprep.mubr.bf16.mxu0 0
        %857 = vmatmul.mubr.bf16.gmra.mxu0 %v753
        %v858 = vpop.f32.mrf.mxu0
        %v859 = vadd.f32 0.0, %v858
        %v860 = vpop.f32.mrf.mxu0
        %v861 = vpop.f32.mrf.mxu0
        %v862 = vadd.f32 0.0, %v861
        %v863 = vpop.f32.mrf.mxu0
        %864 = vmatprep.mubr.bf16.mxu0 0
        %865 = vmatmul.mubr.bf16.gmra.mxu0 %v754
        %v866 = vpop.f32.mrf.mxu0
        %v867 = vadd.f32 0.0, %v866
        %v868 = vpop.f32.mrf.mxu0
        %v869 = vpop.f32.mrf.mxu0
        %v870 = vadd.f32 0.0, %v869
        %v871 = vpop.f32.mrf.mxu0
        %872 = vmatprep.mubr.bf16.mxu0 0
        %873 = vmatmul.mubr.bf16.gmra.mxu0 %v755
        %v874 = vpop.f32.mrf.mxu0
        %v875 = vadd.f32 0.0, %v874
        %v876 = vpop.f32.mrf.mxu0
        %v877 = vpop.f32.mrf.mxu0
        %v878 = vadd.f32 0.0, %v877
        %v879 = vpop.f32.mrf.mxu0
        %880 = vmatprep.mubr.bf16.mxu0 0
        %881 = vmatmul.mubr.bf16.gmra.mxu0 %v756
        %v882 = vpop.f32.mrf.mxu0
        %v883 = vadd.f32 0.0, %v882
        %v884 = vpop.f32.mrf.mxu0
        %v885 = vpop.f32.mrf.mxu0
        %v886 = vadd.f32 0.0, %v885
        %v887 = vpop.f32.mrf.mxu0
        %888 = vmatprep.mubr.bf16.mxu0 0
        %889 = vmatmul.mubr.bf16.gmra.mxu0 %v757
        %v890 = vpop.f32.mrf.mxu0
        %v891 = vadd.f32 0.0, %v890
        %v892 = vpop.f32.mrf.mxu0
        %v893 = vpop.f32.mrf.mxu0
        %v894 = vadd.f32 0.0, %v893
        %v895 = vpop.f32.mrf.mxu0
        %896 = vmatprep.mubr.bf16.mxu0 0
        %897 = vmatmul.mubr.bf16.gmra.mxu0 %v758
        %v898 = vpop.f32.mrf.mxu0
        %v899 = vadd.f32 0.0, %v898
        %v900 = vpop.f32.mrf.mxu0
        %v901 = vpop.f32.mrf.mxu0
        %v902 = vadd.f32 0.0, %v901
        %v903 = vpop.f32.mrf.mxu0
        %904 = vmatprep.mubr.bf16.mxu0 0
        %905 = vmatmul.mubr.bf16.gmra.mxu0 %v759
        %v906 = vpop.f32.mrf.mxu0
        %v907 = vadd.f32 0.0, %v906
        %v908 = vpop.f32.mrf.mxu0
        %v909 = vpop.f32.mrf.mxu0
        %v910 = vadd.f32 0.0, %v909
        %v911 = vpop.f32.mrf.mxu0
        %912 = vdwg.mxu0
        %v913 = vpack.c.bf16 %v854, %v851
        %v914 = vpack.c.bf16 %v862, %v859
        %v915 = vpack.c.bf16 %v870, %v867
        %v916 = vpack.c.bf16 %v878, %v875
        %v917 = vpack.c.bf16 %v886, %v883
        %v918 = vpack.c.bf16 %v894, %v891
        %v919 = vpack.c.bf16 %v902, %v899
        %v920 = vpack.c.bf16 %v910, %v907
        %v922 = vlaneseq
        %v923 = vshrl.u32 %v922, 7
        %v924 = vsub.s32 0, %v923
        %v925 = vrot.slane %v702, %v924
        %v943 = vunpack.c.l.b16 %v686
        %v944 = vunpack.c.l.b16 %v687
        %v945 = vunpack.c.l.b16 %v688
        %v946 = vunpack.c.l.b16 %v689
        %v947 = vunpack.c.l.b16 %v690
        %v948 = vunpack.c.l.b16 %v691
        %v949 = vunpack.c.l.b16 %v692
        %v950 = vunpack.c.l.b16 %v693
        %v951 = vunpack.c.l.b16 %v694
        %v952 = vunpack.c.l.b16 %v695
        %v953 = vunpack.c.l.b16 %v696
        %v954 = vunpack.c.l.b16 %v697
        %v955 = vunpack.c.l.b16 %v698
        %v956 = vunpack.c.l.b16 %v699
        %v957 = vunpack.c.l.b16 %v700
        %v958 = vunpack.c.l.b16 %v701
        %v959 = vpack.c.b16 %v944, %v943
        %v960 = vpack.c.b16 %v946, %v945
        %v961 = vpack.c.b16 %v948, %v947
        %v962 = vpack.c.b16 %v950, %v949
        %v963 = vpack.c.b16 %v952, %v951
        %v964 = vpack.c.b16 %v954, %v953
        %v965 = vpack.c.b16 %v956, %v955
        %v966 = vpack.c.b16 %v958, %v957
        %975 = vmatprep.subr.bf16.mxu0 0
        %976 = vmatpush1.bf16.msra.mxu0 %v966
        %977 = vmatprep.subr.bf16.mxu0 0
        %978 = vmatpush1.bf16.msra.mxu0 %v965
        %979 = vmatprep.subr.bf16.mxu0 0
        %980 = vmatpush1.bf16.msra.mxu0 %v964
        %981 = vmatprep.subr.bf16.mxu0 0
        %982 = vmatpush1.bf16.msra.mxu0 %v963
        %983 = vmatprep.subr.bf16.mxu0 0
        %984 = vmatpush1.bf16.msra.mxu0 %v962
        %985 = vmatprep.subr.bf16.mxu0 0
        %986 = vmatpush1.bf16.msra.mxu0 %v961
        %987 = vmatprep.subr.bf16.mxu0 0
        %988 = vmatpush1.bf16.msra.mxu0 %v960
        %989 = vmatprep.subr.bf16.mxu0 0
        %990 = vmatpush1.bf16.msra.mxu0 %v959
        %991 = vmatprep.subr.bf16.mxu0 0
        %992 = vmatpush2.bf16.msra.mxu0 0
        %993 = vmatprep.subr.bf16.mxu0 0
        %994 = vmatpush2.bf16.msra.mxu0 0
        %995 = vmatprep.subr.bf16.mxu0 0
        %996 = vmatpush2.bf16.msra.mxu0 0
        %997 = vmatprep.subr.bf16.mxu0 0
        %998 = vmatpush2.bf16.msra.mxu0 0
        %999 = vmatprep.subr.bf16.mxu0 0
        %1000 = vmatpush2.bf16.msra.mxu0 0
        %1001 = vmatprep.subr.bf16.mxu0 0
        %1002 = vmatpush2.bf16.msra.mxu0 0
        %1003 = vmatprep.subr.bf16.mxu0 0
        %1004 = vmatpush2.bf16.msra.mxu0 0
        %1005 = vmatprep.subr.bf16.mxu0 0
        %1006 = vmatpush2.bf16.msra.mxu0 0
        %1007 = vmatprep.mubr.bf16.mxu0 0
        %1008 = vmatmul.mubr.bf16.gmra.mxu0 %v913
        %v1009 = vpop.f32.mrf.mxu0
        %v1010 = vadd.f32 %v925, %v1009
        %v1011 = vpop.f32.mrf.mxu0
        %v1012 = vpop.f32.mrf.mxu0
        %v1013 = vadd.f32 %v925, %v1012
        %v1014 = vpop.f32.mrf.mxu0
        %1015 = vmatprep.mubr.bf16.mxu0 0
        %1016 = vmatmul.mubr.bf16.gmra.mxu0 %v914
        %v1017 = vpop.f32.mrf.mxu0
        %v1018 = vadd.f32 %v925, %v1017
        %v1019 = vpop.f32.mrf.mxu0
        %v1020 = vpop.f32.mrf.mxu0
        %v1021 = vadd.f32 %v925, %v1020
        %v1022 = vpop.f32.mrf.mxu0
        %1023 = vmatprep.mubr.bf16.mxu0 0
        %1024 = vmatmul.mubr.bf16.gmra.mxu0 %v915
        %v1025 = vpop.f32.mrf.mxu0
        %v1026 = vadd.f32 %v925, %v1025
        %v1027 = vpop.f32.mrf.mxu0
        %v1028 = vpop.f32.mrf.mxu0
        %v1029 = vadd.f32 %v925, %v1028
        %v1030 = vpop.f32.mrf.mxu0
        %1031 = vmatprep.mubr.bf16.mxu0 0
        %1032 = vmatmul.mubr.bf16.gmra.mxu0 %v916
        %v1033 = vpop.f32.mrf.mxu0
        %v1034 = vadd.f32 %v925, %v1033
        %v1035 = vpop.f32.mrf.mxu0
        %v1036 = vpop.f32.mrf.mxu0
        %v1037 = vadd.f32 %v925, %v1036
        %v1038 = vpop.f32.mrf.mxu0
        %1039 = vmatprep.mubr.bf16.mxu0 0
        %1040 = vmatmul.mubr.bf16.gmra.mxu0 %v917
        %v1041 = vpop.f32.mrf.mxu0
        %v1042 = vadd.f32 %v925, %v1041
        %v1043 = vpop.f32.mrf.mxu0
        %v1044 = vpop.f32.mrf.mxu0
        %v1045 = vadd.f32 %v925, %v1044
        %v1046 = vpop.f32.mrf.mxu0
        %1047 = vmatprep.mubr.bf16.mxu0 0
        %1048 = vmatmul.mubr.bf16.gmra.mxu0 %v918
        %v1049 = vpop.f32.mrf.mxu0
        %v1050 = vadd.f32 %v925, %v1049
        %v1051 = vpop.f32.mrf.mxu0
        %v1052 = vpop.f32.mrf.mxu0
        %v1053 = vadd.f32 %v925, %v1052
        %v1054 = vpop.f32.mrf.mxu0
        %1055 = vmatprep.mubr.bf16.mxu0 0
        %1056 = vmatmul.mubr.bf16.gmra.mxu0 %v919
        %v1057 = vpop.f32.mrf.mxu0
        %v1058 = vadd.f32 %v925, %v1057
        %v1059 = vpop.f32.mrf.mxu0
        %v1060 = vpop.f32.mrf.mxu0
        %v1061 = vadd.f32 %v925, %v1060
        %v1062 = vpop.f32.mrf.mxu0
        %1063 = vmatprep.mubr.bf16.mxu0 0
        %1064 = vmatmul.mubr.bf16.gmra.mxu0 %v920
        %v1065 = vpop.f32.mrf.mxu0
        %v1066 = vadd.f32 %v925, %v1065
        %v1067 = vpop.f32.mrf.mxu0
        %v1068 = vpop.f32.mrf.mxu0
        %v1069 = vadd.f32 %v925, %v1068
        %v1070 = vpop.f32.mrf.mxu0
        %1071 = vdwg.mxu0
        %v1072 = vmax.f32 %v1010, 0.0
        %v1073 = vmax.f32 %v1013, 0.0
        %v1074 = vmax.f32 %v1018, 0.0
        %v1075 = vmax.f32 %v1021, 0.0
        %v1076 = vmax.f32 %v1026, 0.0
        %v1077 = vmax.f32 %v1029, 0.0
        %v1078 = vmax.f32 %v1034, 0.0
        %v1079 = vmax.f32 %v1037, 0.0
        %v1080 = vmax.f32 %v1042, 0.0
        %v1081 = vmax.f32 %v1045, 0.0
        %v1082 = vmax.f32 %v1050, 0.0
        %v1083 = vmax.f32 %v1053, 0.0
        %v1084 = vmax.f32 %v1058, 0.0
        %v1085 = vmax.f32 %v1061, 0.0
        %v1086 = vmax.f32 %v1066, 0.0
        %v1087 = vmax.f32 %v1069, 0.0
        %v1088 = vpack.c.bf16 %v1073, %v1072
        %v1089 = vpack.c.bf16 %v1075, %v1074
        %v1090 = vpack.c.bf16 %v1077, %v1076
        %v1091 = vpack.c.bf16 %v1079, %v1078
        %v1092 = vpack.c.bf16 %v1081, %v1080
        %v1093 = vpack.c.bf16 %v1083, %v1082
        %v1094 = vpack.c.bf16 %v1085, %v1084
        %v1095 = vpack.c.bf16 %v1087, %v1086
        %v1097 = vlaneseq
        %v1098 = vshrl.u32 %v1097, 7
        %v1099 = vsub.s32 0, %v1098
        %v1100 = vrot.slane %v719, %v1099
        %v1118 = vunpack.c.l.b16 %v703
        %v1119 = vunpack.c.l.b16 %v704
        %v1120 = vunpack.c.l.b16 %v705
        %v1121 = vunpack.c.l.b16 %v706
        %v1122 = vunpack.c.l.b16 %v707
        %v1123 = vunpack.c.l.b16 %v708
        %v1124 = vunpack.c.l.b16 %v709
        %v1125 = vunpack.c.l.b16 %v710
        %v1126 = vunpack.c.l.b16 %v711
        %v1127 = vunpack.c.l.b16 %v712
        %v1128 = vunpack.c.l.b16 %v713
        %v1129 = vunpack.c.l.b16 %v714
        %v1130 = vunpack.c.l.b16 %v715
        %v1131 = vunpack.c.l.b16 %v716
        %v1132 = vunpack.c.l.b16 %v717
        %v1133 = vunpack.c.l.b16 %v718
        %v1134 = vpack.c.b16 %v1119, %v1118
        %v1135 = vpack.c.b16 %v1121, %v1120
        %v1136 = vpack.c.b16 %v1123, %v1122
        %v1137 = vpack.c.b16 %v1125, %v1124
        %v1138 = vpack.c.b16 %v1127, %v1126
        %v1139 = vpack.c.b16 %v1129, %v1128
        %v1140 = vpack.c.b16 %v1131, %v1130
        %v1141 = vpack.c.b16 %v1133, %v1132
        %1150 = vmatprep.subr.bf16.mxu0 0
        %1151 = vmatpush1.bf16.msra.mxu0 %v1141
        %1152 = vmatprep.subr.bf16.mxu0 0
        %1153 = vmatpush1.bf16.msra.mxu0 %v1140
        %1154 = vmatprep.subr.bf16.mxu0 0
        %1155 = vmatpush1.bf16.msra.mxu0 %v1139
        %1156 = vmatprep.subr.bf16.mxu0 0
        %1157 = vmatpush1.bf16.msra.mxu0 %v1138
        %1158 = vmatprep.subr.bf16.mxu0 0
        %1159 = vmatpush1.bf16.msra.mxu0 %v1137
        %1160 = vmatprep.subr.bf16.mxu0 0
        %1161 = vmatpush1.bf16.msra.mxu0 %v1136
        %1162 = vmatprep.subr.bf16.mxu0 0
        %1163 = vmatpush1.bf16.msra.mxu0 %v1135
        %1164 = vmatprep.subr.bf16.mxu0 0
        %1165 = vmatpush1.bf16.msra.mxu0 %v1134
        %1166 = vmatprep.subr.bf16.mxu0 0
        %1167 = vmatpush2.bf16.msra.mxu0 0
        %1168 = vmatprep.subr.bf16.mxu0 0
        %1169 = vmatpush2.bf16.msra.mxu0 0
        %1170 = vmatprep.subr.bf16.mxu0 0
        %1171 = vmatpush2.bf16.msra.mxu0 0
        %1172 = vmatprep.subr.bf16.mxu0 0
        %1173 = vmatpush2.bf16.msra.mxu0 0
        %1174 = vmatprep.subr.bf16.mxu0 0
        %1175 = vmatpush2.bf16.msra.mxu0 0
        %1176 = vmatprep.subr.bf16.mxu0 0
        %1177 = vmatpush2.bf16.msra.mxu0 0
        %1178 = vmatprep.subr.bf16.mxu0 0
        %1179 = vmatpush2.bf16.msra.mxu0 0
        %1180 = vmatprep.subr.bf16.mxu0 0
        %1181 = vmatpush2.bf16.msra.mxu0 0
        %1182 = vmatprep.mubr.bf16.mxu0 0
        %1183 = vmatmul.mubr.bf16.gmra.mxu0 %v1088
        %v1184 = vpop.f32.mrf.mxu0
        %v1185 = vadd.f32 %v1100, %v1184
        %v1186 = vpop.f32.mrf.mxu0
        %v1187 = vpop.f32.mrf.mxu0
        %v1188 = vadd.f32 %v1100, %v1187
        %v1189 = vpop.f32.mrf.mxu0
        %1190 = vmatprep.mubr.bf16.mxu0 0
        %1191 = vmatmul.mubr.bf16.gmra.mxu0 %v1089
        %v1192 = vpop.f32.mrf.mxu0
        %v1193 = vadd.f32 %v1100, %v1192
        %v1194 = vpop.f32.mrf.mxu0
        %v1195 = vpop.f32.mrf.mxu0
        %v1196 = vadd.f32 %v1100, %v1195
        %v1197 = vpop.f32.mrf.mxu0
        %1198 = vmatprep.mubr.bf16.mxu0 0
        %1199 = vmatmul.mubr.bf16.gmra.mxu0 %v1090
        %v1200 = vpop.f32.mrf.mxu0
        %v1201 = vadd.f32 %v1100, %v1200
        %v1202 = vpop.f32.mrf.mxu0
        %v1203 = vpop.f32.mrf.mxu0
        %v1204 = vadd.f32 %v1100, %v1203
        %v1205 = vpop.f32.mrf.mxu0
        %1206 = vmatprep.mubr.bf16.mxu0 0
        %1207 = vmatmul.mubr.bf16.gmra.mxu0 %v1091
        %v1208 = vpop.f32.mrf.mxu0
        %v1209 = vadd.f32 %v1100, %v1208
        %v1210 = vpop.f32.mrf.mxu0
        %v1211 = vpop.f32.mrf.mxu0
        %v1212 = vadd.f32 %v1100, %v1211
        %v1213 = vpop.f32.mrf.mxu0
        %1214 = vmatprep.mubr.bf16.mxu0 0
        %1215 = vmatmul.mubr.bf16.gmra.mxu0 %v1092
        %v1216 = vpop.f32.mrf.mxu0
        %v1217 = vadd.f32 %v1100, %v1216
        %v1218 = vpop.f32.mrf.mxu0
        %v1219 = vpop.f32.mrf.mxu0
        %v1220 = vadd.f32 %v1100, %v1219
        %v1221 = vpop.f32.mrf.mxu0
        %1222 = vmatprep.mubr.bf16.mxu0 0
        %1223 = vmatmul.mubr.bf16.gmra.mxu0 %v1093
        %v1224 = vpop.f32.mrf.mxu0
        %v1225 = vadd.f32 %v1100, %v1224
        %v1226 = vpop.f32.mrf.mxu0
        %v1227 = vpop.f32.mrf.mxu0
        %v1228 = vadd.f32 %v1100, %v1227
        %v1229 = vpop.f32.mrf.mxu0
        %1230 = vmatprep.mubr.bf16.mxu0 0
        %1231 = vmatmul.mubr.bf16.gmra.mxu0 %v1094
        %v1232 = vpop.f32.mrf.mxu0
        %v1233 = vadd.f32 %v1100, %v1232
        %v1234 = vpop.f32.mrf.mxu0
        %v1235 = vpop.f32.mrf.mxu0
        %v1236 = vadd.f32 %v1100, %v1235
        %v1237 = vpop.f32.mrf.mxu0
        %1238 = vmatprep.mubr.bf16.mxu0 0
        %1239 = vmatmul.mubr.bf16.gmra.mxu0 %v1095
        %v1240 = vpop.f32.mrf.mxu0
        %v1241 = vadd.f32 %v1100, %v1240
        %v1242 = vpop.f32.mrf.mxu0
        %v1243 = vpop.f32.mrf.mxu0
        %v1244 = vadd.f32 %v1100, %v1243
        %v1245 = vpop.f32.mrf.mxu0
        %1246 = vdwg.mxu0
        %v1247 = vmax.f32 %v1185, 0.0
        %v1248 = vmax.f32 %v1188, 0.0
        %v1249 = vmax.f32 %v1193, 0.0
        %v1250 = vmax.f32 %v1196, 0.0
        %v1251 = vmax.f32 %v1201, 0.0
        %v1252 = vmax.f32 %v1204, 0.0
        %v1253 = vmax.f32 %v1209, 0.0
        %v1254 = vmax.f32 %v1212, 0.0
        %v1255 = vmax.f32 %v1217, 0.0
        %v1256 = vmax.f32 %v1220, 0.0
        %v1257 = vmax.f32 %v1225, 0.0
        %v1258 = vmax.f32 %v1228, 0.0
        %v1259 = vmax.f32 %v1233, 0.0
        %v1260 = vmax.f32 %v1236, 0.0
        %v1261 = vmax.f32 %v1241, 0.0
        %v1262 = vmax.f32 %v1244, 0.0
        %v1263 = vpack.c.bf16 %v1248, %v1247
        %v1264 = vpack.c.bf16 %v1250, %v1249
        %v1265 = vpack.c.bf16 %v1252, %v1251
        %v1266 = vpack.c.bf16 %v1254, %v1253
        %v1267 = vpack.c.bf16 %v1256, %v1255
        %v1268 = vpack.c.bf16 %v1258, %v1257
        %v1269 = vpack.c.bf16 %v1260, %v1259
        %v1270 = vpack.c.bf16 %v1262, %v1261
        %v1271 = vld [vmem:[#allocation10] sm:$0xf]
        %v1272 = vld [vmem:[#allocation10 + $0x4] sm:$0xf]
        %v1273 = vld [vmem:[#allocation10 + $0x8] sm:$0xf]
        %v1274 = vld [vmem:[#allocation10 + $0xc] sm:$0xf]
        %v1275 = vld [vmem:[#allocation10 + $0x10] sm:$0xf]
        %v1276 = vld [vmem:[#allocation10 + $0x14] sm:$0xf]
        %v1277 = vld [vmem:[#allocation10 + $0x18] sm:$0xf]
        %v1278 = vld [vmem:[#allocation10 + $0x1c] sm:$0xf]
        %v1279 = vld [vmem:[#allocation10 + $0x20] sm:$0xf]
        %v1280 = vld [vmem:[#allocation10 + $0x24] sm:$0xf]
        %v1281 = vld [vmem:[#allocation10 + $0x28] sm:$0xf]
        %v1282 = vld [vmem:[#allocation10 + $0x2c] sm:$0xf]
        %v1283 = vld [vmem:[#allocation10 + $0x30] sm:$0xf]
        %v1284 = vld [vmem:[#allocation10 + $0x34] sm:$0xf]
        %v1285 = vld [vmem:[#allocation10 + $0x38] sm:$0xf]
        %v1286 = vld [vmem:[#allocation10 + $0x3c] sm:$0xf]
        %v1287 = vld [vmem:[%s8] sm:$0x1]
        %v1288 = vld [vmem:[#allocation11] sm:$0xf]
        %v1289 = vld [vmem:[#allocation11 + $0x4] sm:$0xf]
        %v1290 = vld [vmem:[#allocation11 + $0x8] sm:$0xf]
        %v1291 = vld [vmem:[#allocation11 + $0xc] sm:$0xf]
        %v1292 = vld [vmem:[#allocation11 + $0x10] sm:$0xf]
        %v1293 = vld [vmem:[#allocation11 + $0x14] sm:$0xf]
        %v1294 = vld [vmem:[#allocation11 + $0x18] sm:$0xf]
        %v1295 = vld [vmem:[#allocation11 + $0x1c] sm:$0xf]
        %v1296 = vld [vmem:[#allocation11 + $0x20] sm:$0xf]
        %v1297 = vld [vmem:[#allocation11 + $0x24] sm:$0xf]
        %v1298 = vld [vmem:[#allocation11 + $0x28] sm:$0xf]
        %v1299 = vld [vmem:[#allocation11 + $0x2c] sm:$0xf]
        %v1300 = vld [vmem:[#allocation11 + $0x30] sm:$0xf]
        %v1301 = vld [vmem:[#allocation11 + $0x34] sm:$0xf]
        %v1302 = vld [vmem:[#allocation11 + $0x38] sm:$0xf]
        %v1303 = vld [vmem:[#allocation11 + $0x3c] sm:$0xf]
        %v1304 = vld [vmem:[%s10] sm:$0x1]
        %1305 = vmatprep.subr.bf16.mxu0 0
        %1306 = vmatpush1.bf16.msra.mxu0 %v1270
        %1307 = vmatprep.subr.bf16.mxu0 0
        %1308 = vmatpush1.bf16.msra.mxu0 %v1269
        %1309 = vmatprep.subr.bf16.mxu0 0
        %1310 = vmatpush1.bf16.msra.mxu0 %v1268
        %1311 = vmatprep.subr.bf16.mxu0 0
        %1312 = vmatpush1.bf16.msra.mxu0 %v1267
        %1313 = vmatprep.subr.bf16.mxu0 0
        %1314 = vmatpush1.bf16.msra.mxu0 %v1266
        %1315 = vmatprep.subr.bf16.mxu0 0
        %1316 = vmatpush1.bf16.msra.mxu0 %v1265
        %1317 = vmatprep.subr.bf16.mxu0 0
        %1318 = vmatpush1.bf16.msra.mxu0 %v1264
        %1319 = vmatprep.subr.bf16.mxu0 0
        %1320 = vmatpush1.bf16.msra.mxu0 %v1263
        %1321 = vmatprep.subr.bf16.mxu0 0
        %1322 = vmatpush2.bf16.msra.mxu0 0
        %1323 = vmatprep.subr.bf16.mxu0 0
        %1324 = vmatpush2.bf16.msra.mxu0 0
        %1325 = vmatprep.subr.bf16.mxu0 0
        %1326 = vmatpush2.bf16.msra.mxu0 0
        %1327 = vmatprep.subr.bf16.mxu0 0
        %1328 = vmatpush2.bf16.msra.mxu0 0
        %1329 = vmatprep.subr.bf16.mxu0 0
        %1330 = vmatpush2.bf16.msra.mxu0 0
        %1331 = vmatprep.subr.bf16.mxu0 0
        %1332 = vmatpush2.bf16.msra.mxu0 0
        %1333 = vmatprep.subr.bf16.mxu0 0
        %1334 = vmatpush2.bf16.msra.mxu0 0
        %1335 = vmatprep.subr.bf16.mxu0 0
        %1336 = vmatpush2.bf16.msra.mxu0 0
        %1337 = vmatprep.mubr.bf16.mxu0 0
        %1338 = vmatmul.mubr.bf16.gmra.mxu0 %v752
        %v1339 = vpop.f32.mrf.mxu0
        %v1340 = vadd.f32 0.0, %v1339
        %v1341 = vpop.f32.mrf.mxu0
        %v1342 = vpop.f32.mrf.mxu0
        %v1343 = vadd.f32 0.0, %v1342
        %v1344 = vpop.f32.mrf.mxu0
        %1345 = vmatprep.mubr.bf16.mxu0 0
        %1346 = vmatmul.mubr.bf16.gmra.mxu0 %v753
        %v1347 = vpop.f32.mrf.mxu0
        %v1348 = vadd.f32 0.0, %v1347
        %v1349 = vpop.f32.mrf.mxu0
        %v1350 = vpop.f32.mrf.mxu0
        %v1351 = vadd.f32 0.0, %v1350
        %v1352 = vpop.f32.mrf.mxu0
        %1353 = vmatprep.mubr.bf16.mxu0 0
        %1354 = vmatmul.mubr.bf16.gmra.mxu0 %v754
        %v1355 = vpop.f32.mrf.mxu0
        %v1356 = vadd.f32 0.0, %v1355
        %v1357 = vpop.f32.mrf.mxu0
        %v1358 = vpop.f32.mrf.mxu0
        %v1359 = vadd.f32 0.0, %v1358
        %v1360 = vpop.f32.mrf.mxu0
        %1361 = vmatprep.mubr.bf16.mxu0 0
        %1362 = vmatmul.mubr.bf16.gmra.mxu0 %v755
        %v1363 = vpop.f32.mrf.mxu0
        %v1364 = vadd.f32 0.0, %v1363
        %v1365 = vpop.f32.mrf.mxu0
        %v1366 = vpop.f32.mrf.mxu0
        %v1367 = vadd.f32 0.0, %v1366
        %v1368 = vpop.f32.mrf.mxu0
        %1369 = vmatprep.mubr.bf16.mxu0 0
        %1370 = vmatmul.mubr.bf16.gmra.mxu0 %v756
        %v1371 = vpop.f32.mrf.mxu0
        %v1372 = vadd.f32 0.0, %v1371
        %v1373 = vpop.f32.mrf.mxu0
        %v1374 = vpop.f32.mrf.mxu0
        %v1375 = vadd.f32 0.0, %v1374
        %v1376 = vpop.f32.mrf.mxu0
        %1377 = vmatprep.mubr.bf16.mxu0 0
        %1378 = vmatmul.mubr.bf16.gmra.mxu0 %v757
        %v1379 = vpop.f32.mrf.mxu0
        %v1380 = vadd.f32 0.0, %v1379
        %v1381 = vpop.f32.mrf.mxu0
        %v1382 = vpop.f32.mrf.mxu0
        %v1383 = vadd.f32 0.0, %v1382
        %v1384 = vpop.f32.mrf.mxu0
        %1385 = vmatprep.mubr.bf16.mxu0 0
        %1386 = vmatmul.mubr.bf16.gmra.mxu0 %v758
        %v1387 = vpop.f32.mrf.mxu0
        %v1388 = vadd.f32 0.0, %v1387
        %v1389 = vpop.f32.mrf.mxu0
        %v1390 = vpop.f32.mrf.mxu0
        %v1391 = vadd.f32 0.0, %v1390
        %v1392 = vpop.f32.mrf.mxu0
        %1393 = vmatprep.mubr.bf16.mxu0 0
        %1394 = vmatmul.mubr.bf16.gmra.mxu0 %v759
        %v1395 = vpop.f32.mrf.mxu0
        %v1396 = vadd.f32 0.0, %v1395
        %v1397 = vpop.f32.mrf.mxu0
        %v1398 = vpop.f32.mrf.mxu0
        %v1399 = vadd.f32 0.0, %v1398
        %v1400 = vpop.f32.mrf.mxu0
        %1401 = vdwg.mxu0
        %v1402 = vpack.c.bf16 %v1343, %v1340
        %v1403 = vpack.c.bf16 %v1351, %v1348
        %v1404 = vpack.c.bf16 %v1359, %v1356
        %v1405 = vpack.c.bf16 %v1367, %v1364
        %v1406 = vpack.c.bf16 %v1375, %v1372
        %v1407 = vpack.c.bf16 %v1383, %v1380
        %v1408 = vpack.c.bf16 %v1391, %v1388
        %v1409 = vpack.c.bf16 %v1399, %v1396
        %v1411 = vlaneseq
        %v1412 = vshrl.u32 %v1411, 7
        %v1413 = vsub.s32 0, %v1412
        %v1414 = vrot.slane %v1287, %v1413
        %v1432 = vunpack.c.l.b16 %v1271
        %v1433 = vunpack.c.l.b16 %v1272
        %v1434 = vunpack.c.l.b16 %v1273
        %v1435 = vunpack.c.l.b16 %v1274
        %v1436 = vunpack.c.l.b16 %v1275
        %v1437 = vunpack.c.l.b16 %v1276
        %v1438 = vunpack.c.l.b16 %v1277
        %v1439 = vunpack.c.l.b16 %v1278
        %v1440 = vunpack.c.l.b16 %v1279
        %v1441 = vunpack.c.l.b16 %v1280
        %v1442 = vunpack.c.l.b16 %v1281
        %v1443 = vunpack.c.l.b16 %v1282
        %v1444 = vunpack.c.l.b16 %v1283
        %v1445 = vunpack.c.l.b16 %v1284
        %v1446 = vunpack.c.l.b16 %v1285
        %v1447 = vunpack.c.l.b16 %v1286
        %v1448 = vpack.c.b16 %v1433, %v1432
        %v1449 = vpack.c.b16 %v1435, %v1434
        %v1450 = vpack.c.b16 %v1437, %v1436
        %v1451 = vpack.c.b16 %v1439, %v1438
        %v1452 = vpack.c.b16 %v1441, %v1440
        %v1453 = vpack.c.b16 %v1443, %v1442
        %v1454 = vpack.c.b16 %v1445, %v1444
        %v1455 = vpack.c.b16 %v1447, %v1446
        %1464 = vmatprep.subr.bf16.mxu0 0
        %1465 = vmatpush1.bf16.msra.mxu0 %v1455
        %1466 = vmatprep.subr.bf16.mxu0 0
        %1467 = vmatpush1.bf16.msra.mxu0 %v1454
        %1468 = vmatprep.subr.bf16.mxu0 0
        %1469 = vmatpush1.bf16.msra.mxu0 %v1453
        %1470 = vmatprep.subr.bf16.mxu0 0
        %1471 = vmatpush1.bf16.msra.mxu0 %v1452
        %1472 = vmatprep.subr.bf16.mxu0 0
        %1473 = vmatpush1.bf16.msra.mxu0 %v1451
        %1474 = vmatprep.subr.bf16.mxu0 0
        %1475 = vmatpush1.bf16.msra.mxu0 %v1450
        %1476 = vmatprep.subr.bf16.mxu0 0
        %1477 = vmatpush1.bf16.msra.mxu0 %v1449
        %1478 = vmatprep.subr.bf16.mxu0 0
        %1479 = vmatpush1.bf16.msra.mxu0 %v1448
        %1480 = vmatprep.subr.bf16.mxu0 0
        %1481 = vmatpush2.bf16.msra.mxu0 0
        %1482 = vmatprep.subr.bf16.mxu0 0
        %1483 = vmatpush2.bf16.msra.mxu0 0
        %1484 = vmatprep.subr.bf16.mxu0 0
        %1485 = vmatpush2.bf16.msra.mxu0 0
        %1486 = vmatprep.subr.bf16.mxu0 0
        %1487 = vmatpush2.bf16.msra.mxu0 0
        %1488 = vmatprep.subr.bf16.mxu0 0
        %1489 = vmatpush2.bf16.msra.mxu0 0
        %1490 = vmatprep.subr.bf16.mxu0 0
        %1491 = vmatpush2.bf16.msra.mxu0 0
        %1492 = vmatprep.subr.bf16.mxu0 0
        %1493 = vmatpush2.bf16.msra.mxu0 0
        %1494 = vmatprep.subr.bf16.mxu0 0
        %1495 = vmatpush2.bf16.msra.mxu0 0
        %1496 = vmatprep.mubr.bf16.mxu0 0
        %1497 = vmatmul.mubr.bf16.gmra.mxu0 %v1402
        %v1498 = vpop.f32.mrf.mxu0
        %v1499 = vadd.f32 %v1414, %v1498
        %v1500 = vpop.f32.mrf.mxu0
        %v1501 = vpop.f32.mrf.mxu0
        %v1502 = vadd.f32 %v1414, %v1501
        %v1503 = vpop.f32.mrf.mxu0
        %1504 = vmatprep.mubr.bf16.mxu0 0
        %1505 = vmatmul.mubr.bf16.gmra.mxu0 %v1403
        %v1506 = vpop.f32.mrf.mxu0
        %v1507 = vadd.f32 %v1414, %v1506
        %v1508 = vpop.f32.mrf.mxu0
        %v1509 = vpop.f32.mrf.mxu0
        %v1510 = vadd.f32 %v1414, %v1509
        %v1511 = vpop.f32.mrf.mxu0
        %1512 = vmatprep.mubr.bf16.mxu0 0
        %1513 = vmatmul.mubr.bf16.gmra.mxu0 %v1404
        %v1514 = vpop.f32.mrf.mxu0
        %v1515 = vadd.f32 %v1414, %v1514
        %v1516 = vpop.f32.mrf.mxu0
        %v1517 = vpop.f32.mrf.mxu0
        %v1518 = vadd.f32 %v1414, %v1517
        %v1519 = vpop.f32.mrf.mxu0
        %1520 = vmatprep.mubr.bf16.mxu0 0
        %1521 = vmatmul.mubr.bf16.gmra.mxu0 %v1405
        %v1522 = vpop.f32.mrf.mxu0
        %v1523 = vadd.f32 %v1414, %v1522
        %v1524 = vpop.f32.mrf.mxu0
        %v1525 = vpop.f32.mrf.mxu0
        %v1526 = vadd.f32 %v1414, %v1525
        %v1527 = vpop.f32.mrf.mxu0
        %1528 = vmatprep.mubr.bf16.mxu0 0
        %1529 = vmatmul.mubr.bf16.gmra.mxu0 %v1406
        %v1530 = vpop.f32.mrf.mxu0
        %v1531 = vadd.f32 %v1414, %v1530
        %v1532 = vpop.f32.mrf.mxu0
        %v1533 = vpop.f32.mrf.mxu0
        %v1534 = vadd.f32 %v1414, %v1533
        %v1535 = vpop.f32.mrf.mxu0
        %1536 = vmatprep.mubr.bf16.mxu0 0
        %1537 = vmatmul.mubr.bf16.gmra.mxu0 %v1407
        %v1538 = vpop.f32.mrf.mxu0
        %v1539 = vadd.f32 %v1414, %v1538
        %v1540 = vpop.f32.mrf.mxu0
        %v1541 = vpop.f32.mrf.mxu0
        %v1542 = vadd.f32 %v1414, %v1541
        %v1543 = vpop.f32.mrf.mxu0
        %1544 = vmatprep.mubr.bf16.mxu0 0
        %1545 = vmatmul.mubr.bf16.gmra.mxu0 %v1408
        %v1546 = vpop.f32.mrf.mxu0
        %v1547 = vadd.f32 %v1414, %v1546
        %v1548 = vpop.f32.mrf.mxu0
        %v1549 = vpop.f32.mrf.mxu0
        %v1550 = vadd.f32 %v1414, %v1549
        %v1551 = vpop.f32.mrf.mxu0
        %1552 = vmatprep.mubr.bf16.mxu0 0
        %1553 = vmatmul.mubr.bf16.gmra.mxu0 %v1409
        %v1554 = vpop.f32.mrf.mxu0
        %v1555 = vadd.f32 %v1414, %v1554
        %v1556 = vpop.f32.mrf.mxu0
        %v1557 = vpop.f32.mrf.mxu0
        %v1558 = vadd.f32 %v1414, %v1557
        %v1559 = vpop.f32.mrf.mxu0
        %1560 = vdwg.mxu0
        %v1561 = vmax.f32 %v1499, 0.0
        %v1562 = vmax.f32 %v1502, 0.0
        %v1563 = vmax.f32 %v1507, 0.0
        %v1564 = vmax.f32 %v1510, 0.0
        %v1565 = vmax.f32 %v1515, 0.0
        %v1566 = vmax.f32 %v1518, 0.0
        %v1567 = vmax.f32 %v1523, 0.0
        %v1568 = vmax.f32 %v1526, 0.0
        %v1569 = vmax.f32 %v1531, 0.0
        %v1570 = vmax.f32 %v1534, 0.0
        %v1571 = vmax.f32 %v1539, 0.0
        %v1572 = vmax.f32 %v1542, 0.0
        %v1573 = vmax.f32 %v1547, 0.0
        %v1574 = vmax.f32 %v1550, 0.0
        %v1575 = vmax.f32 %v1555, 0.0
        %v1576 = vmax.f32 %v1558, 0.0
        %v1577 = vpack.c.bf16 %v1562, %v1561
        %v1578 = vpack.c.bf16 %v1564, %v1563
        %v1579 = vpack.c.bf16 %v1566, %v1565
        %v1580 = vpack.c.bf16 %v1568, %v1567
        %v1581 = vpack.c.bf16 %v1570, %v1569
        %v1582 = vpack.c.bf16 %v1572, %v1571
        %v1583 = vpack.c.bf16 %v1574, %v1573
        %v1584 = vpack.c.bf16 %v1576, %v1575
        %v1586 = vlaneseq
        %v1587 = vshrl.u32 %v1586, 7
        %v1588 = vsub.s32 0, %v1587
        %v1589 = vrot.slane %v1304, %v1588
        %v1607 = vunpack.c.l.b16 %v1288
        %v1608 = vunpack.c.l.b16 %v1289
        %v1609 = vunpack.c.l.b16 %v1290
        %v1610 = vunpack.c.l.b16 %v1291
        %v1611 = vunpack.c.l.b16 %v1292
        %v1612 = vunpack.c.l.b16 %v1293
        %v1613 = vunpack.c.l.b16 %v1294
        %v1614 = vunpack.c.l.b16 %v1295
        %v1615 = vunpack.c.l.b16 %v1296
        %v1616 = vunpack.c.l.b16 %v1297
        %v1617 = vunpack.c.l.b16 %v1298
        %v1618 = vunpack.c.l.b16 %v1299
        %v1619 = vunpack.c.l.b16 %v1300
        %v1620 = vunpack.c.l.b16 %v1301
        %v1621 = vunpack.c.l.b16 %v1302
        %v1622 = vunpack.c.l.b16 %v1303
        %v1623 = vpack.c.b16 %v1608, %v1607
        %v1624 = vpack.c.b16 %v1610, %v1609
        %v1625 = vpack.c.b16 %v1612, %v1611
        %v1626 = vpack.c.b16 %v1614, %v1613
        %v1627 = vpack.c.b16 %v1616, %v1615
        %v1628 = vpack.c.b16 %v1618, %v1617
        %v1629 = vpack.c.b16 %v1620, %v1619
        %v1630 = vpack.c.b16 %v1622, %v1621
        %1639 = vmatprep.subr.bf16.mxu0 0
        %1640 = vmatpush1.bf16.msra.mxu0 %v1630
        %1641 = vmatprep.subr.bf16.mxu0 0
        %1642 = vmatpush1.bf16.msra.mxu0 %v1629
        %1643 = vmatprep.subr.bf16.mxu0 0
        %1644 = vmatpush1.bf16.msra.mxu0 %v1628
        %1645 = vmatprep.subr.bf16.mxu0 0
        %1646 = vmatpush1.bf16.msra.mxu0 %v1627
        %1647 = vmatprep.subr.bf16.mxu0 0
        %1648 = vmatpush1.bf16.msra.mxu0 %v1626
        %1649 = vmatprep.subr.bf16.mxu0 0
        %1650 = vmatpush1.bf16.msra.mxu0 %v1625
        %1651 = vmatprep.subr.bf16.mxu0 0
        %1652 = vmatpush1.bf16.msra.mxu0 %v1624
        %1653 = vmatprep.subr.bf16.mxu0 0
        %1654 = vmatpush1.bf16.msra.mxu0 %v1623
        %1655 = vmatprep.subr.bf16.mxu0 0
        %1656 = vmatpush2.bf16.msra.mxu0 0
        %1657 = vmatprep.subr.bf16.mxu0 0
        %1658 = vmatpush2.bf16.msra.mxu0 0
        %1659 = vmatprep.subr.bf16.mxu0 0
        %1660 = vmatpush2.bf16.msra.mxu0 0
        %1661 = vmatprep.subr.bf16.mxu0 0
        %1662 = vmatpush2.bf16.msra.mxu0 0
        %1663 = vmatprep.subr.bf16.mxu0 0
        %1664 = vmatpush2.bf16.msra.mxu0 0
        %1665 = vmatprep.subr.bf16.mxu0 0
        %1666 = vmatpush2.bf16.msra.mxu0 0
        %1667 = vmatprep.subr.bf16.mxu0 0
        %1668 = vmatpush2.bf16.msra.mxu0 0
        %1669 = vmatprep.subr.bf16.mxu0 0
        %1670 = vmatpush2.bf16.msra.mxu0 0
        %1671 = vmatprep.mubr.bf16.mxu0 0
        %1672 = vmatmul.mubr.bf16.gmra.mxu0 %v1577
        %v1673 = vpop.f32.mrf.mxu0
        %v1674 = vadd.f32 %v1589, %v1673
        %v1675 = vpop.f32.mrf.mxu0
        %v1676 = vpop.f32.mrf.mxu0
        %v1677 = vadd.f32 %v1589, %v1676
        %v1678 = vpop.f32.mrf.mxu0
        %1679 = vmatprep.mubr.bf16.mxu0 0
        %1680 = vmatmul.mubr.bf16.gmra.mxu0 %v1578
        %v1681 = vpop.f32.mrf.mxu0
        %v1682 = vadd.f32 %v1589, %v1681
        %v1683 = vpop.f32.mrf.mxu0
        %v1684 = vpop.f32.mrf.mxu0
        %v1685 = vadd.f32 %v1589, %v1684
        %v1686 = vpop.f32.mrf.mxu0
        %1687 = vmatprep.mubr.bf16.mxu0 0
        %1688 = vmatmul.mubr.bf16.gmra.mxu0 %v1579
        %v1689 = vpop.f32.mrf.mxu0
        %v1690 = vadd.f32 %v1589, %v1689
        %v1691 = vpop.f32.mrf.mxu0
        %v1692 = vpop.f32.mrf.mxu0
        %v1693 = vadd.f32 %v1589, %v1692
        %v1694 = vpop.f32.mrf.mxu0
        %1695 = vmatprep.mubr.bf16.mxu0 0
        %1696 = vmatmul.mubr.bf16.gmra.mxu0 %v1580
        %v1697 = vpop.f32.mrf.mxu0
        %v1698 = vadd.f32 %v1589, %v1697
        %v1699 = vpop.f32.mrf.mxu0
        %v1700 = vpop.f32.mrf.mxu0
        %v1701 = vadd.f32 %v1589, %v1700
        %v1702 = vpop.f32.mrf.mxu0
        %1703 = vmatprep.mubr.bf16.mxu0 0
        %1704 = vmatmul.mubr.bf16.gmra.mxu0 %v1581
        %v1705 = vpop.f32.mrf.mxu0
        %v1706 = vadd.f32 %v1589, %v1705
        %v1707 = vpop.f32.mrf.mxu0
        %v1708 = vpop.f32.mrf.mxu0
        %v1709 = vadd.f32 %v1589, %v1708
        %v1710 = vpop.f32.mrf.mxu0
        %1711 = vmatprep.mubr.bf16.mxu0 0
        %1712 = vmatmul.mubr.bf16.gmra.mxu0 %v1582
        %v1713 = vpop.f32.mrf.mxu0
        %v1714 = vadd.f32 %v1589, %v1713
        %v1715 = vpop.f32.mrf.mxu0
        %v1716 = vpop.f32.mrf.mxu0
        %v1717 = vadd.f32 %v1589, %v1716
        %v1718 = vpop.f32.mrf.mxu0
        %1719 = vmatprep.mubr.bf16.mxu0 0
        %1720 = vmatmul.mubr.bf16.gmra.mxu0 %v1583
        %v1721 = vpop.f32.mrf.mxu0
        %v1722 = vadd.f32 %v1589, %v1721
        %v1723 = vpop.f32.mrf.mxu0
        %v1724 = vpop.f32.mrf.mxu0
        %v1725 = vadd.f32 %v1589, %v1724
        %v1726 = vpop.f32.mrf.mxu0
        %1727 = vmatprep.mubr.bf16.mxu0 0
        %1728 = vmatmul.mubr.bf16.gmra.mxu0 %v1584
        %v1729 = vpop.f32.mrf.mxu0
        %v1730 = vadd.f32 %v1589, %v1729
        %v1731 = vpop.f32.mrf.mxu0
        %v1732 = vpop.f32.mrf.mxu0
        %v1733 = vadd.f32 %v1589, %v1732
        %v1734 = vpop.f32.mrf.mxu0
        %1735 = vdwg.mxu0
        %v1736 = vmax.f32 %v1674, 0.0
        %v1737 = vmax.f32 %v1677, 0.0
        %v1738 = vmax.f32 %v1682, 0.0
        %v1739 = vmax.f32 %v1685, 0.0
        %v1740 = vmax.f32 %v1690, 0.0
        %v1741 = vmax.f32 %v1693, 0.0
        %v1742 = vmax.f32 %v1698, 0.0
        %v1743 = vmax.f32 %v1701, 0.0
        %v1744 = vmax.f32 %v1706, 0.0
        %v1745 = vmax.f32 %v1709, 0.0
        %v1746 = vmax.f32 %v1714, 0.0
        %v1747 = vmax.f32 %v1717, 0.0
        %v1748 = vmax.f32 %v1722, 0.0
        %v1749 = vmax.f32 %v1725, 0.0
        %v1750 = vmax.f32 %v1730, 0.0
        %v1751 = vmax.f32 %v1733, 0.0
        %v1752 = vpack.c.bf16 %v1737, %v1736
        %v1753 = vpack.c.bf16 %v1739, %v1738
        %v1754 = vpack.c.bf16 %v1741, %v1740
        %v1755 = vpack.c.bf16 %v1743, %v1742
        %v1756 = vpack.c.bf16 %v1745, %v1744
        %v1757 = vpack.c.bf16 %v1747, %v1746
        %v1758 = vpack.c.bf16 %v1749, %v1748
        %v1759 = vpack.c.bf16 %v1751, %v1750
        %v1760 = vld [vmem:[#allocation13] sm:$0xf]
        %v1761 = vld [vmem:[#allocation13 + $0x4] sm:$0xf]
        %v1762 = vld [vmem:[#allocation13 + $0x8] sm:$0xf]
        %v1763 = vld [vmem:[#allocation13 + $0xc] sm:$0xf]
        %v1764 = vld [vmem:[#allocation13 + $0x10] sm:$0xf]
        %v1765 = vld [vmem:[#allocation13 + $0x14] sm:$0xf]
        %v1766 = vld [vmem:[#allocation13 + $0x18] sm:$0xf]
        %v1767 = vld [vmem:[#allocation13 + $0x1c] sm:$0xf]
        %v1768 = vld [vmem:[#allocation13 + $0x20] sm:$0xf]
        %v1769 = vld [vmem:[#allocation13 + $0x24] sm:$0xf]
        %v1770 = vld [vmem:[#allocation13 + $0x28] sm:$0xf]
        %v1771 = vld [vmem:[#allocation13 + $0x2c] sm:$0xf]
        %v1772 = vld [vmem:[#allocation13 + $0x30] sm:$0xf]
        %v1773 = vld [vmem:[#allocation13 + $0x34] sm:$0xf]
        %v1774 = vld [vmem:[#allocation13 + $0x38] sm:$0xf]
        %v1775 = vld [vmem:[#allocation13 + $0x3c] sm:$0xf]
        %v1776 = vld [vmem:[%s12] sm:$0x1]
        %v1777 = vld [vmem:[#allocation14] sm:$0xf]
        %v1778 = vld [vmem:[#allocation14 + $0x4] sm:$0xf]
        %v1779 = vld [vmem:[#allocation14 + $0x8] sm:$0xf]
        %v1780 = vld [vmem:[#allocation14 + $0xc] sm:$0xf]
        %v1781 = vld [vmem:[#allocation14 + $0x10] sm:$0xf]
        %v1782 = vld [vmem:[#allocation14 + $0x14] sm:$0xf]
        %v1783 = vld [vmem:[#allocation14 + $0x18] sm:$0xf]
        %v1784 = vld [vmem:[#allocation14 + $0x1c] sm:$0xf]
        %v1785 = vld [vmem:[#allocation14 + $0x20] sm:$0xf]
        %v1786 = vld [vmem:[#allocation14 + $0x24] sm:$0xf]
        %v1787 = vld [vmem:[#allocation14 + $0x28] sm:$0xf]
        %v1788 = vld [vmem:[#allocation14 + $0x2c] sm:$0xf]
        %v1789 = vld [vmem:[#allocation14 + $0x30] sm:$0xf]
        %v1790 = vld [vmem:[#allocation14 + $0x34] sm:$0xf]
        %v1791 = vld [vmem:[#allocation14 + $0x38] sm:$0xf]
        %v1792 = vld [vmem:[#allocation14 + $0x3c] sm:$0xf]
        %v1793 = vld [vmem:[%s14] sm:$0x1]
        %1794 = vmatprep.subr.bf16.mxu0 0
        %1795 = vmatpush1.bf16.msra.mxu0 %v1759
        %1796 = vmatprep.subr.bf16.mxu0 0
        %1797 = vmatpush1.bf16.msra.mxu0 %v1758
        %1798 = vmatprep.subr.bf16.mxu0 0
        %1799 = vmatpush1.bf16.msra.mxu0 %v1757
        %1800 = vmatprep.subr.bf16.mxu0 0
        %1801 = vmatpush1.bf16.msra.mxu0 %v1756
        %1802 = vmatprep.subr.bf16.mxu0 0
        %1803 = vmatpush1.bf16.msra.mxu0 %v1755
        %1804 = vmatprep.subr.bf16.mxu0 0
        %1805 = vmatpush1.bf16.msra.mxu0 %v1754
        %1806 = vmatprep.subr.bf16.mxu0 0
        %1807 = vmatpush1.bf16.msra.mxu0 %v1753
        %1808 = vmatprep.subr.bf16.mxu0 0
        %1809 = vmatpush1.bf16.msra.mxu0 %v1752
        %1810 = vmatprep.subr.bf16.mxu0 0
        %1811 = vmatpush2.bf16.msra.mxu0 0
        %1812 = vmatprep.subr.bf16.mxu0 0
        %1813 = vmatpush2.bf16.msra.mxu0 0
        %1814 = vmatprep.subr.bf16.mxu0 0
        %1815 = vmatpush2.bf16.msra.mxu0 0
        %1816 = vmatprep.subr.bf16.mxu0 0
        %1817 = vmatpush2.bf16.msra.mxu0 0
        %1818 = vmatprep.subr.bf16.mxu0 0
        %1819 = vmatpush2.bf16.msra.mxu0 0
        %1820 = vmatprep.subr.bf16.mxu0 0
        %1821 = vmatpush2.bf16.msra.mxu0 0
        %1822 = vmatprep.subr.bf16.mxu0 0
        %1823 = vmatpush2.bf16.msra.mxu0 0
        %1824 = vmatprep.subr.bf16.mxu0 0
        %1825 = vmatpush2.bf16.msra.mxu0 0
        %1826 = vmatprep.mubr.bf16.mxu0 0
        %1827 = vmatmul.mubr.bf16.gmra.mxu0 %v752
        %v1828 = vpop.f32.mrf.mxu0
        %v1829 = vadd.f32 0.0, %v1828
        %v1830 = vpop.f32.mrf.mxu0
        %v1831 = vpop.f32.mrf.mxu0
        %v1832 = vadd.f32 0.0, %v1831
        %v1833 = vpop.f32.mrf.mxu0
        %1834 = vmatprep.mubr.bf16.mxu0 0
        %1835 = vmatmul.mubr.bf16.gmra.mxu0 %v753
        %v1836 = vpop.f32.mrf.mxu0
        %v1837 = vadd.f32 0.0, %v1836
        %v1838 = vpop.f32.mrf.mxu0
        %v1839 = vpop.f32.mrf.mxu0
        %v1840 = vadd.f32 0.0, %v1839
        %v1841 = vpop.f32.mrf.mxu0
        %1842 = vmatprep.mubr.bf16.mxu0 0
        %1843 = vmatmul.mubr.bf16.gmra.mxu0 %v754
        %v1844 = vpop.f32.mrf.mxu0
        %v1845 = vadd.f32 0.0, %v1844
        %v1846 = vpop.f32.mrf.mxu0
        %v1847 = vpop.f32.mrf.mxu0
        %v1848 = vadd.f32 0.0, %v1847
        %v1849 = vpop.f32.mrf.mxu0
        %1850 = vmatprep.mubr.bf16.mxu0 0
        %1851 = vmatmul.mubr.bf16.gmra.mxu0 %v755
        %v1852 = vpop.f32.mrf.mxu0
        %v1853 = vadd.f32 0.0, %v1852
        %v1854 = vpop.f32.mrf.mxu0
        %v1855 = vpop.f32.mrf.mxu0
        %v1856 = vadd.f32 0.0, %v1855
        %v1857 = vpop.f32.mrf.mxu0
        %1858 = vmatprep.mubr.bf16.mxu0 0
        %1859 = vmatmul.mubr.bf16.gmra.mxu0 %v756
        %v1860 = vpop.f32.mrf.mxu0
        %v1861 = vadd.f32 0.0, %v1860
        %v1862 = vpop.f32.mrf.mxu0
        %v1863 = vpop.f32.mrf.mxu0
        %v1864 = vadd.f32 0.0, %v1863
        %v1865 = vpop.f32.mrf.mxu0
        %1866 = vmatprep.mubr.bf16.mxu0 0
        %1867 = vmatmul.mubr.bf16.gmra.mxu0 %v757
        %v1868 = vpop.f32.mrf.mxu0
        %v1869 = vadd.f32 0.0, %v1868
        %v1870 = vpop.f32.mrf.mxu0
        %v1871 = vpop.f32.mrf.mxu0
        %v1872 = vadd.f32 0.0, %v1871
        %v1873 = vpop.f32.mrf.mxu0
        %1874 = vmatprep.mubr.bf16.mxu0 0
        %1875 = vmatmul.mubr.bf16.gmra.mxu0 %v758
        %v1876 = vpop.f32.mrf.mxu0
        %v1877 = vadd.f32 0.0, %v1876
        %v1878 = vpop.f32.mrf.mxu0
        %v1879 = vpop.f32.mrf.mxu0
        %v1880 = vadd.f32 0.0, %v1879
        %v1881 = vpop.f32.mrf.mxu0
        %1882 = vmatprep.mubr.bf16.mxu0 0
        %1883 = vmatmul.mubr.bf16.gmra.mxu0 %v759
        %v1884 = vpop.f32.mrf.mxu0
        %v1885 = vadd.f32 0.0, %v1884
        %v1886 = vpop.f32.mrf.mxu0
        %v1887 = vpop.f32.mrf.mxu0
        %v1888 = vadd.f32 0.0, %v1887
        %v1889 = vpop.f32.mrf.mxu0
        %1890 = vdwg.mxu0
        %v1891 = vpack.c.bf16 %v1832, %v1829
        %v1892 = vpack.c.bf16 %v1840, %v1837
        %v1893 = vpack.c.bf16 %v1848, %v1845
        %v1894 = vpack.c.bf16 %v1856, %v1853
        %v1895 = vpack.c.bf16 %v1864, %v1861
        %v1896 = vpack.c.bf16 %v1872, %v1869
        %v1897 = vpack.c.bf16 %v1880, %v1877
        %v1898 = vpack.c.bf16 %v1888, %v1885
        %v1900 = vlaneseq
        %v1901 = vshrl.u32 %v1900, 7
        %v1902 = vsub.s32 0, %v1901
        %v1903 = vrot.slane %v1776, %v1902
        %v1921 = vunpack.c.l.b16 %v1760
        %v1922 = vunpack.c.l.b16 %v1761
        %v1923 = vunpack.c.l.b16 %v1762
        %v1924 = vunpack.c.l.b16 %v1763
        %v1925 = vunpack.c.l.b16 %v1764
        %v1926 = vunpack.c.l.b16 %v1765
        %v1927 = vunpack.c.l.b16 %v1766
        %v1928 = vunpack.c.l.b16 %v1767
        %v1929 = vunpack.c.l.b16 %v1768
        %v1930 = vunpack.c.l.b16 %v1769
        %v1931 = vunpack.c.l.b16 %v1770
        %v1932 = vunpack.c.l.b16 %v1771
        %v1933 = vunpack.c.l.b16 %v1772
        %v1934 = vunpack.c.l.b16 %v1773
        %v1935 = vunpack.c.l.b16 %v1774
        %v1936 = vunpack.c.l.b16 %v1775
        %v1937 = vpack.c.b16 %v1922, %v1921
        %v1938 = vpack.c.b16 %v1924, %v1923
        %v1939 = vpack.c.b16 %v1926, %v1925
        %v1940 = vpack.c.b16 %v1928, %v1927
        %v1941 = vpack.c.b16 %v1930, %v1929
        %v1942 = vpack.c.b16 %v1932, %v1931
        %v1943 = vpack.c.b16 %v1934, %v1933
        %v1944 = vpack.c.b16 %v1936, %v1935
        %1953 = vmatprep.subr.bf16.mxu0 0
        %1954 = vmatpush1.bf16.msra.mxu0 %v1944
        %1955 = vmatprep.subr.bf16.mxu0 0
        %1956 = vmatpush1.bf16.msra.mxu0 %v1943
        %1957 = vmatprep.subr.bf16.mxu0 0
        %1958 = vmatpush1.bf16.msra.mxu0 %v1942
        %1959 = vmatprep.subr.bf16.mxu0 0
        %1960 = vmatpush1.bf16.msra.mxu0 %v1941
        %1961 = vmatprep.subr.bf16.mxu0 0
        %1962 = vmatpush1.bf16.msra.mxu0 %v1940
        %1963 = vmatprep.subr.bf16.mxu0 0
        %1964 = vmatpush1.bf16.msra.mxu0 %v1939
        %1965 = vmatprep.subr.bf16.mxu0 0
        %1966 = vmatpush1.bf16.msra.mxu0 %v1938
        %1967 = vmatprep.subr.bf16.mxu0 0
        %1968 = vmatpush1.bf16.msra.mxu0 %v1937
        %1969 = vmatprep.subr.bf16.mxu0 0
        %1970 = vmatpush2.bf16.msra.mxu0 0
        %1971 = vmatprep.subr.bf16.mxu0 0
        %1972 = vmatpush2.bf16.msra.mxu0 0
        %1973 = vmatprep.subr.bf16.mxu0 0
        %1974 = vmatpush2.bf16.msra.mxu0 0
        %1975 = vmatprep.subr.bf16.mxu0 0
        %1976 = vmatpush2.bf16.msra.mxu0 0
        %1977 = vmatprep.subr.bf16.mxu0 0
        %1978 = vmatpush2.bf16.msra.mxu0 0
        %1979 = vmatprep.subr.bf16.mxu0 0
        %1980 = vmatpush2.bf16.msra.mxu0 0
        %1981 = vmatprep.subr.bf16.mxu0 0
        %1982 = vmatpush2.bf16.msra.mxu0 0
        %1983 = vmatprep.subr.bf16.mxu0 0
        %1984 = vmatpush2.bf16.msra.mxu0 0
        %1985 = vmatprep.mubr.bf16.mxu0 0
        %1986 = vmatmul.mubr.bf16.gmra.mxu0 %v1891
        %v1987 = vpop.f32.mrf.mxu0
        %v1988 = vadd.f32 %v1903, %v1987
        %v1989 = vpop.f32.mrf.mxu0
        %v1990 = vpop.f32.mrf.mxu0
        %v1991 = vadd.f32 %v1903, %v1990
        %v1992 = vpop.f32.mrf.mxu0
        %1993 = vmatprep.mubr.bf16.mxu0 0
        %1994 = vmatmul.mubr.bf16.gmra.mxu0 %v1892
        %v1995 = vpop.f32.mrf.mxu0
        %v1996 = vadd.f32 %v1903, %v1995
        %v1997 = vpop.f32.mrf.mxu0
        %v1998 = vpop.f32.mrf.mxu0
        %v1999 = vadd.f32 %v1903, %v1998
        %v2000 = vpop.f32.mrf.mxu0
        %2001 = vmatprep.mubr.bf16.mxu0 0
        %2002 = vmatmul.mubr.bf16.gmra.mxu0 %v1893
        %v2003 = vpop.f32.mrf.mxu0
        %v2004 = vadd.f32 %v1903, %v2003
        %v2005 = vpop.f32.mrf.mxu0
        %v2006 = vpop.f32.mrf.mxu0
        %v2007 = vadd.f32 %v1903, %v2006
        %v2008 = vpop.f32.mrf.mxu0
        %2009 = vmatprep.mubr.bf16.mxu0 0
        %2010 = vmatmul.mubr.bf16.gmra.mxu0 %v1894
        %v2011 = vpop.f32.mrf.mxu0
        %v2012 = vadd.f32 %v1903, %v2011
        %v2013 = vpop.f32.mrf.mxu0
        %v2014 = vpop.f32.mrf.mxu0
        %v2015 = vadd.f32 %v1903, %v2014
        %v2016 = vpop.f32.mrf.mxu0
        %2017 = vmatprep.mubr.bf16.mxu0 0
        %2018 = vmatmul.mubr.bf16.gmra.mxu0 %v1895
        %v2019 = vpop.f32.mrf.mxu0
        %v2020 = vadd.f32 %v1903, %v2019
        %v2021 = vpop.f32.mrf.mxu0
        %v2022 = vpop.f32.mrf.mxu0
        %v2023 = vadd.f32 %v1903, %v2022
        %v2024 = vpop.f32.mrf.mxu0
        %2025 = vmatprep.mubr.bf16.mxu0 0
        %2026 = vmatmul.mubr.bf16.gmra.mxu0 %v1896
        %v2027 = vpop.f32.mrf.mxu0
        %v2028 = vadd.f32 %v1903, %v2027
        %v2029 = vpop.f32.mrf.mxu0
        %v2030 = vpop.f32.mrf.mxu0
        %v2031 = vadd.f32 %v1903, %v2030
        %v2032 = vpop.f32.mrf.mxu0
        %2033 = vmatprep.mubr.bf16.mxu0 0
        %2034 = vmatmul.mubr.bf16.gmra.mxu0 %v1897
        %v2035 = vpop.f32.mrf.mxu0
        %v2036 = vadd.f32 %v1903, %v2035
        %v2037 = vpop.f32.mrf.mxu0
        %v2038 = vpop.f32.mrf.mxu0
        %v2039 = vadd.f32 %v1903, %v2038
        %v2040 = vpop.f32.mrf.mxu0
        %2041 = vmatprep.mubr.bf16.mxu0 0
        %2042 = vmatmul.mubr.bf16.gmra.mxu0 %v1898
        %v2043 = vpop.f32.mrf.mxu0
        %v2044 = vadd.f32 %v1903, %v2043
        %v2045 = vpop.f32.mrf.mxu0
        %v2046 = vpop.f32.mrf.mxu0
        %v2047 = vadd.f32 %v1903, %v2046
        %v2048 = vpop.f32.mrf.mxu0
        %2049 = vdwg.mxu0
        %v2050 = vmax.f32 %v1988, 0.0
        %v2051 = vmax.f32 %v1991, 0.0
        %v2052 = vmax.f32 %v1996, 0.0
        %v2053 = vmax.f32 %v1999, 0.0
        %v2054 = vmax.f32 %v2004, 0.0
        %v2055 = vmax.f32 %v2007, 0.0
        %v2056 = vmax.f32 %v2012, 0.0
        %v2057 = vmax.f32 %v2015, 0.0
        %v2058 = vmax.f32 %v2020, 0.0
        %v2059 = vmax.f32 %v2023, 0.0
        %v2060 = vmax.f32 %v2028, 0.0
        %v2061 = vmax.f32 %v2031, 0.0
        %v2062 = vmax.f32 %v2036, 0.0
        %v2063 = vmax.f32 %v2039, 0.0
        %v2064 = vmax.f32 %v2044, 0.0
        %v2065 = vmax.f32 %v2047, 0.0
        %v2066 = vpack.c.bf16 %v2051, %v2050
        %v2067 = vpack.c.bf16 %v2053, %v2052
        %v2068 = vpack.c.bf16 %v2055, %v2054
        %v2069 = vpack.c.bf16 %v2057, %v2056
        %v2070 = vpack.c.bf16 %v2059, %v2058
        %v2071 = vpack.c.bf16 %v2061, %v2060
        %v2072 = vpack.c.bf16 %v2063, %v2062
        %v2073 = vpack.c.bf16 %v2065, %v2064
        %v2075 = vlaneseq
        %v2076 = vshrl.u32 %v2075, 7
        %v2077 = vsub.s32 0, %v2076
        %v2078 = vrot.slane %v1793, %v2077
        %v2096 = vunpack.c.l.b16 %v1777
        %v2097 = vunpack.c.l.b16 %v1778
        %v2098 = vunpack.c.l.b16 %v1779
        %v2099 = vunpack.c.l.b16 %v1780
        %v2100 = vunpack.c.l.b16 %v1781
        %v2101 = vunpack.c.l.b16 %v1782
        %v2102 = vunpack.c.l.b16 %v1783
        %v2103 = vunpack.c.l.b16 %v1784
        %v2104 = vunpack.c.l.b16 %v1785
        %v2105 = vunpack.c.l.b16 %v1786
        %v2106 = vunpack.c.l.b16 %v1787
        %v2107 = vunpack.c.l.b16 %v1788
        %v2108 = vunpack.c.l.b16 %v1789
        %v2109 = vunpack.c.l.b16 %v1790
        %v2110 = vunpack.c.l.b16 %v1791
        %v2111 = vunpack.c.l.b16 %v1792
        %v2112 = vpack.c.b16 %v2097, %v2096
        %v2113 = vpack.c.b16 %v2099, %v2098
        %v2114 = vpack.c.b16 %v2101, %v2100
        %v2115 = vpack.c.b16 %v2103, %v2102
        %v2116 = vpack.c.b16 %v2105, %v2104
        %v2117 = vpack.c.b16 %v2107, %v2106
        %v2118 = vpack.c.b16 %v2109, %v2108
        %v2119 = vpack.c.b16 %v2111, %v2110
        %2128 = vmatprep.subr.bf16.mxu0 0
        %2129 = vmatpush1.bf16.msra.mxu0 %v2119
        %2130 = vmatprep.subr.bf16.mxu0 0
        %2131 = vmatpush1.bf16.msra.mxu0 %v2118
        %2132 = vmatprep.subr.bf16.mxu0 0
        %2133 = vmatpush1.bf16.msra.mxu0 %v2117
        %2134 = vmatprep.subr.bf16.mxu0 0
        %2135 = vmatpush1.bf16.msra.mxu0 %v2116
        %2136 = vmatprep.subr.bf16.mxu0 0
        %2137 = vmatpush1.bf16.msra.mxu0 %v2115
        %2138 = vmatprep.subr.bf16.mxu0 0
        %2139 = vmatpush1.bf16.msra.mxu0 %v2114
        %2140 = vmatprep.subr.bf16.mxu0 0
        %2141 = vmatpush1.bf16.msra.mxu0 %v2113
        %2142 = vmatprep.subr.bf16.mxu0 0
        %2143 = vmatpush1.bf16.msra.mxu0 %v2112
        %2144 = vmatprep.subr.bf16.mxu0 0
        %2145 = vmatpush2.bf16.msra.mxu0 0
        %2146 = vmatprep.subr.bf16.mxu0 0
        %2147 = vmatpush2.bf16.msra.mxu0 0
        %2148 = vmatprep.subr.bf16.mxu0 0
        %2149 = vmatpush2.bf16.msra.mxu0 0
        %2150 = vmatprep.subr.bf16.mxu0 0
        %2151 = vmatpush2.bf16.msra.mxu0 0
        %2152 = vmatprep.subr.bf16.mxu0 0
        %2153 = vmatpush2.bf16.msra.mxu0 0
        %2154 = vmatprep.subr.bf16.mxu0 0
        %2155 = vmatpush2.bf16.msra.mxu0 0
        %2156 = vmatprep.subr.bf16.mxu0 0
        %2157 = vmatpush2.bf16.msra.mxu0 0
        %2158 = vmatprep.subr.bf16.mxu0 0
        %2159 = vmatpush2.bf16.msra.mxu0 0
        %2160 = vmatprep.mubr.bf16.mxu0 0
        %2161 = vmatmul.mubr.bf16.gmra.mxu0 %v2066
        %v2162 = vpop.f32.mrf.mxu0
        %v2163 = vadd.f32 %v2078, %v2162
        %v2164 = vpop.f32.mrf.mxu0
        %v2165 = vpop.f32.mrf.mxu0
        %v2166 = vadd.f32 %v2078, %v2165
        %v2167 = vpop.f32.mrf.mxu0
        %2168 = vmatprep.mubr.bf16.mxu0 0
        %2169 = vmatmul.mubr.bf16.gmra.mxu0 %v2067
        %v2170 = vpop.f32.mrf.mxu0
        %v2171 = vadd.f32 %v2078, %v2170
        %v2172 = vpop.f32.mrf.mxu0
        %v2173 = vpop.f32.mrf.mxu0
        %v2174 = vadd.f32 %v2078, %v2173
        %v2175 = vpop.f32.mrf.mxu0
        %2176 = vmatprep.mubr.bf16.mxu0 0
        %2177 = vmatmul.mubr.bf16.gmra.mxu0 %v2068
        %v2178 = vpop.f32.mrf.mxu0
        %v2179 = vadd.f32 %v2078, %v2178
        %v2180 = vpop.f32.mrf.mxu0
        %v2181 = vpop.f32.mrf.mxu0
        %v2182 = vadd.f32 %v2078, %v2181
        %v2183 = vpop.f32.mrf.mxu0
        %2184 = vmatprep.mubr.bf16.mxu0 0
        %2185 = vmatmul.mubr.bf16.gmra.mxu0 %v2069
        %v2186 = vpop.f32.mrf.mxu0
        %v2187 = vadd.f32 %v2078, %v2186
        %v2188 = vpop.f32.mrf.mxu0
        %v2189 = vpop.f32.mrf.mxu0
        %v2190 = vadd.f32 %v2078, %v2189
        %v2191 = vpop.f32.mrf.mxu0
        %2192 = vmatprep.mubr.bf16.mxu0 0
        %2193 = vmatmul.mubr.bf16.gmra.mxu0 %v2070
        %v2194 = vpop.f32.mrf.mxu0
        %v2195 = vadd.f32 %v2078, %v2194
        %v2196 = vpop.f32.mrf.mxu0
        %v2197 = vpop.f32.mrf.mxu0
        %v2198 = vadd.f32 %v2078, %v2197
        %v2199 = vpop.f32.mrf.mxu0
        %2200 = vmatprep.mubr.bf16.mxu0 0
        %2201 = vmatmul.mubr.bf16.gmra.mxu0 %v2071
        %v2202 = vpop.f32.mrf.mxu0
        %v2203 = vadd.f32 %v2078, %v2202
        %v2204 = vpop.f32.mrf.mxu0
        %v2205 = vpop.f32.mrf.mxu0
        %v2206 = vadd.f32 %v2078, %v2205
        %v2207 = vpop.f32.mrf.mxu0
        %2208 = vmatprep.mubr.bf16.mxu0 0
        %2209 = vmatmul.mubr.bf16.gmra.mxu0 %v2072
        %v2210 = vpop.f32.mrf.mxu0
        %v2211 = vadd.f32 %v2078, %v2210
        %v2212 = vpop.f32.mrf.mxu0
        %v2213 = vpop.f32.mrf.mxu0
        %v2214 = vadd.f32 %v2078, %v2213
        %v2215 = vpop.f32.mrf.mxu0
        %2216 = vmatprep.mubr.bf16.mxu0 0
        %2217 = vmatmul.mubr.bf16.gmra.mxu0 %v2073
        %v2218 = vpop.f32.mrf.mxu0
        %v2219 = vadd.f32 %v2078, %v2218
        %v2220 = vpop.f32.mrf.mxu0
        %v2221 = vpop.f32.mrf.mxu0
        %v2222 = vadd.f32 %v2078, %v2221
        %v2223 = vpop.f32.mrf.mxu0
        %2224 = vdwg.mxu0
        %v2225 = vpack.c.bf16 %v2166, %v2163
        %v2226 = vpack.c.bf16 %v2174, %v2171
        %v2227 = vpack.c.bf16 %v2182, %v2179
        %v2228 = vpack.c.bf16 %v2190, %v2187
        %v2229 = vpack.c.bf16 %v2198, %v2195
        %v2230 = vpack.c.bf16 %v2206, %v2203
        %v2231 = vpack.c.bf16 %v2214, %v2211
        %v2232 = vpack.c.bf16 %v2222, %v2219
        %v2233 = vld [vmem:[%s652] sm:$0x1]
        %2234 = vmatprep.subr.bf16.mxu0 0
        %2235 = vmatpush1.bf16.msra.mxu0 %v2232
        %2236 = vmatprep.subr.bf16.mxu0 0
        %2237 = vmatpush1.bf16.msra.mxu0 %v2231
        %2238 = vmatprep.subr.bf16.mxu0 0
        %2239 = vmatpush1.bf16.msra.mxu0 %v2230
        %2240 = vmatprep.subr.bf16.mxu0 0
        %2241 = vmatpush1.bf16.msra.mxu0 %v2229
        %2242 = vmatprep.subr.bf16.mxu0 0
        %2243 = vmatpush1.bf16.msra.mxu0 %v2228
        %2244 = vmatprep.subr.bf16.mxu0 0
        %2245 = vmatpush1.bf16.msra.mxu0 %v2227
        %2246 = vmatprep.subr.bf16.mxu0 0
        %2247 = vmatpush1.bf16.msra.mxu0 %v2226
        %2248 = vmatprep.subr.bf16.mxu0 0
        %2249 = vmatpush1.bf16.msra.mxu0 %v2225
        %2250 = vmatprep.subr.bf16.mxu0 0
        %2251 = vmatpush2.bf16.msra.mxu0 0
        %2252 = vmatprep.subr.bf16.mxu0 0
        %2253 = vmatpush2.bf16.msra.mxu0 0
        %2254 = vmatprep.subr.bf16.mxu0 0
        %2255 = vmatpush2.bf16.msra.mxu0 0
        %2256 = vmatprep.subr.bf16.mxu0 0
        %2257 = vmatpush2.bf16.msra.mxu0 0
        %2258 = vmatprep.subr.bf16.mxu0 0
        %2259 = vmatpush2.bf16.msra.mxu0 0
        %2260 = vmatprep.subr.bf16.mxu0 0
        %2261 = vmatpush2.bf16.msra.mxu0 0
        %2262 = vmatprep.subr.bf16.mxu0 0
        %2263 = vmatpush2.bf16.msra.mxu0 0
        %2264 = vmatprep.subr.bf16.mxu0 0
        %2265 = vmatpush2.bf16.msra.mxu0 0
        %2266 = vmatprep.mubr.bf16.mxu0 0
        %2267 = vmatmul.mubr.bf16.gmra.mxu0 %v2233
        %v2268 = vpop.f32.mrf.mxu0
        %v2269 = vadd.f32 0.0, %v2268
        %v2270 = vpop.f32.mrf.mxu0
        %v2271 = vpop.f32.mrf.mxu0
        %v2272 = vpop.f32.mrf.mxu0
        %2273 = vdwg.mxu0
        %v2274 = vunpack.c.l.bf16 %v2233
        %vm2275 = vcmask 1040384
        %v2276 = vsel %vm2275, %v2274, 0.0
        %2277 = vadd.xlane.f32.xlu0 %v2276
        %v2278 = vpop.xlane.xlu0 %2277
        %v2279 = vrot.slane %v2278, 4
        %v2280 = vadd.f32 %v2278, %v2279
        %v2281 = vrot.slane %v2280, 2
        %v2282 = vadd.f32 %v2280, %v2281
        %v2283 = vrot.slane %v2282, 1
        %v2284 = vadd.f32 %v2282, %v2283
        %s2285 = vtos %v2284
        %v2286 = vstv %s2285
        %v2287 = vrcp.pop %v2286
        %s2288 = vtos %v2287
        %v2289 = vstv %s2288
        %v2290 = vmul.f32 %v2269, %v2289
        %v2291 = vlaneseq
        %v2292 = vand.u32 %v2291, 127
        %vm2293 = vcmp.lt.s32.totalorder %v2292, 4
        %v2294 = vsel %vm2293, %v2290, -1e+30
        %v2295 = vsel %vm2275, %v2294, -inf
        %2296 = vmax.xlane.f32.xlu0 %v2295
        %v2297 = vpop.xlane.xlu0 %2296
        %v2298 = vsub.f32 %v2294, %v2297
        %v2299 = vmul.f32 %v2298, 1.442695
        %v2300 = vpow.pop %v2299
        %v2301 = vsel %vm2293, %v2300, 0.0
        %v2302 = vsel %vm2275, %v2301, 0.0
        %2303 = vadd.xlane.f32.xlu0 %v2302
        %v2304 = vpop.xlane.xlu0 %2303
        %v2305 = vlog2.pop %v2304
        %v2306 = vmul.f32 %v2305, 0.6931472
        %v2307 = vsub.f32 %v2298, %v2306
        %2308 = vst [vmem:[%s649] sm:$0x1] %v2307
        %s2309 = sand.u32 %s376, 1
        %s2310 = scalar_lea.sflag [#allocation4], %s2309
        %s2311 = sand.u32 %s376, 1
        %s2312 = scalar_lea.vmem [#allocation16], %s2311
        // Predicated region
        $region113: #{tpu_custom_call.1} parent=79 // pred_check
          %p2313 = pneg %p386
        $region114: #{tpu_custom_call.1} parent=79 // pred_check_branch
          %2315 = sbr.rel (%p2313) target = $region116
        $region115: #{tpu_custom_call.1} parent=79 // pred_region
          %s2317 = ssub.s32 16, 16
          %2318 = vsyncadd %s2310, %s2317
          %s2319 = smul.addr %s38, 16
          %s2320 = scalar_lea.hbm %s15, %s2319
          %s2322 = sshll.u32 %s2312, 4
          %s2323 = int_to_ptr.vmem [resolvable:$true] %s2322
          %2325 = dma.vmem_to_hbm [thread:$0]  %s2323, 16, %s2320, %s2310
        $region116: #{tpu_custom_call.1} parent=79 // pred_fallthru
          _
      $region80: #{tpu_custom_call.1} parent=5 // pred_fallthru
        _
      %p2326 = scmp.le.s32.totalorder 2, %s33
      // Predicated region
      $region117: #{tpu_custom_call.1} parent=5 // pred_check
        %p2327 = pneg %p2326
      $region118: #{tpu_custom_call.1} parent=5 // pred_check_branch
        %2329 = sbr.rel (%p2327) target = $region120
      $region119: #{tpu_custom_call.1} parent=5 // pred_region
        %s2330 = ssub.s32 %s33, 2
        // Predicated region
        $region121: #{tpu_custom_call.1} parent=119 // pred_check
          %p2331 = pneg %p392
        $region122: #{tpu_custom_call.1} parent=119 // pred_check_branch
          %2333 = sbr.rel (%p2331) target = $region124
        $region123: #{tpu_custom_call.1} parent=119 // pred_region
          %s2334 = sand.u32 %s377, 1
          %s2335 = scalar_lea.sflag [#allocation4], %s2334
          %s2336 = sand.u32 %s377, 1
          %s2337 = scalar_lea.vmem [#allocation16], %s2336
          %2338 = dma.done %s2335, 16
        $region124: #{tpu_custom_call.1} parent=119 // pred_fallthru
          _
      $region120: #{tpu_custom_call.1} parent=5 // pred_fallthru
        _
    $region6: #{tpu_custom_call.1} parent=1 // loop_footer
      %s37 = sadd.s32 1, %s33
    $region7: #{tpu_custom_call.1} parent=1 // loop_footer_branch
      %32 = sbr.rel target = $region3
    $region8: #{tpu_custom_call.1} parent=1 // loop_exit
      _
    %2339 = vsyncpa [#allocation3], 1
    %s2340 = scalar_lea.sflag [#allocation3], 1
    %2341 = vsyncpa %s2340, 1
    %2342 = vsyncpa [#allocation6], 1
    %s2343 = scalar_lea.sflag [#allocation6], 1
    %2344 = vsyncpa %s2343, 1
    %2345 = vsyncpa [#allocation9], 1
    %2346 = vsyncpa [#allocation12], 1
    %2347 = vsyncpa [#allocation15], 1
    %2348 = vsyncpa [#allocation4], 1
    %s2349 = scalar_lea.sflag [#allocation4], 1
    %2350 = vsyncpa %s2349, 1

</llo_original>
